<compile_context>
chip_gen: v7x
topology: tpu7x:2x2x1
jax: 0.10.0
libtpu: 0.0.40
codegen_flags: <defaults>
</compile_context>

<pallas_src>
import functools
import math

import jax
import jax.numpy as jnp
import numpy as np
from jax.experimental import pallas as pl
from jax.experimental.pallas import tpu as pltpu


_TAPS = tuple((dh, dw) for dh in range(3) for dw in range(3))


# --------------------- host-side constants (cached per (H, W)) ---------------------

@functools.lru_cache(maxsize=None)
def _dft_and_tap_masks(H, W):
    """[fr | fi] 2-D DFT operator (ortho scale folded in) and the 9 im2col masks."""
    HW = H * W
    idx = np.arange(HW)
    ih, iw = idx // W, idx % W
    # F2[p, q] = exp(-2*pi*i*(h_p*h_q/H + w_p*w_q/W)); exact integer products + f64
    # for accurate twiddles. Pre-scaled by 1/sqrt(HW): the same matrix is used by
    # both the forward and inverse stage, so the scaling is applied twice for free.
    ph = np.mod(np.outer(ih, ih), H) / H
    pw = np.mod(np.outer(iw, iw), W) / W
    ang = -2.0 * np.pi * (ph + pw)
    s = 1.0 / math.sqrt(HW)
    frfi = np.concatenate([np.cos(ang) * s, np.sin(ang) * s], axis=1).astype(np.float32)

    # mask[t, p] = 1 iff tap (dh, dw) of output pixel p=(h, w) reads an in-bounds
    # input pixel (pad=1 zero padding), t = dh*3 + dw.
    masks = np.zeros((9, HW), np.float32)
    for t, (dh, dw) in enumerate(_TAPS):
        hh, ww = ih + dh - 1, iw + dw - 1
        masks[t] = ((hh >= 0) & (hh < H) & (ww >= 0) & (ww < W)).astype(np.float32)
    return jnp.asarray(frfi), jnp.asarray(masks)


# --------------------------------- fused kernel ------------------------------------

def _flex_sf_kernel(x_ref, masks_ref, frfi_ref,
                    wini_ref, bini_ref, wr_ref, wi_ref,
                    ws1_ref, bs1_ref, ws2_ref, bs2_ref, wc_ref, bc_ref,
                    out_ref,
                    cols_ref, yst_ref, xcat_ref, *, H, W):
    HW = H * W
    masks = masks_ref[...]                                   # (9, HW) in {0, 1}

    def im2col(x2d):
        # x2d: (cin, HW) flattened image rows. Builds cols[(dh*3+dw)*cin + c, p] =
        # x[c, h+dh-1, w+dw-1] (0 outside) with lane rolls + masks, so the 3x3 conv
        # stays a single K=9*cin MXU matmul.
        cin = x2d.shape[0]
        for t, (dh, dw) in enumerate(_TAPS):
            s = (dh - 1) * W + (dw - 1)                      # flattened tap offset
            shifted = x2d if s == 0 else pltpu.roll(x2d, shift=(-s) % HW, axis=1)
            cols_ref[t * cin:(t + 1) * cin, :] = shifted * masks[t:t + 1, :]
        return cols_ref[0:9 * cin, :]                        # loaded value snapshot

    def dense(cols, w_ref, b_ref, relu):
        y = jnp.dot(w_ref[...], cols, preferred_element_type=jnp.float32) + b_ref[...]
        return jnp.maximum(y, 0.0) if relu else y

    x2d = x_ref[0]                                           # (Cin, HW)

    # iniF and the first S conv read the same image -> share one im2col.
    cols_x = im2col(x2d)
    xf0 = dense(cols_x, wini_ref, bini_ref, relu=False)      # (C4, HW)
    h1 = dense(cols_x, ws1_ref, bs1_ref, relu=True)          # (OC2, HW)

    # Fourier filter: ortho fft2 / per-channel complex weight / ortho ifft2 as two
    # stacked lane-dense matmuls against [fr | fi] (norm pre-folded on host).
    c4 = xf0.shape[0]
    frfi = frfi_ref[...]                                     # (HW, 2*HW)
    xf_c = jnp.dot(xf0, frfi, preferred_element_type=jnp.float32)   # (C4, 2*HW)
    xr, xi = xf_c[:, :HW], xf_c[:, HW:]
    wr, wi = wr_ref[...], wi_ref[...]
    yst_ref[0:c4, :] = xr * wr - xi * wi                     # Re(Y)
    yst_ref[c4:2 * c4, :] = xr * wi + xi * wr                # Im(Y)
    z2 = jnp.dot(yst_ref[...], frfi, preferred_element_type=jnp.float32)  # (2C4, 2HW)
    zr = z2[0:c4, 0:HW] + z2[c4:2 * c4, HW:2 * HW]           # Re(ifft2)
    zi = z2[c4:2 * c4, 0:HW] - z2[0:c4, HW:2 * HW]           # Im(ifft2)

    # Second S conv.
    xs = dense(im2col(h1), ws2_ref, bs2_ref, relu=True)      # (OC2, HW)

    # cat([xs, xf], dim=1) lives in VMEM scratch; final conv+BN+ReLU.
    oc2 = xs.shape[0]
    xcat_ref[0:oc2, :] = xs
    xcat_ref[oc2:oc2 + c4, :] = zr
    xcat_ref[oc2 + c4:oc2 + 2 * c4, :] = zi
    out_ref[0] = dense(im2col(xcat_ref[...]), wc_ref, bc_ref, relu=True)


# --------------------------------- host wrappers ------------------------------------

def _fold_conv_weight(w, scale):
    """(Cout, Cin, 3, 3) * per-channel BN scale -> (Cout, 9*Cin), tap-major layout."""
    cout, cin = w.shape[0], w.shape[1]
    wf = w.astype(jnp.float32) * scale.astype(jnp.float32)[:, None, None, None]
    return jnp.transpose(wf, (0, 2, 3, 1)).reshape(cout, 9 * cin)


def _interp_bilinear_align_corners(w, out_h, out_w):
    """Bilinear resize of (F, fh, fw, 2) over the spatial dims, align_corners=True."""
    F_, fh, fw, _ = w.shape
    if (fh, fw) == (out_h, out_w):
        return w
    ys = jnp.linspace(0.0, fh - 1.0, out_h)
    xs = jnp.linspace(0.0, fw - 1.0, out_w)
    y0 = jnp.clip(jnp.floor(ys).astype(jnp.int32), 0, fh - 1)
    x0 = jnp.clip(jnp.floor(xs).astype(jnp.int32), 0, fw - 1)
    y1 = jnp.minimum(y0 + 1, fh - 1)
    x1 = jnp.minimum(x0 + 1, fw - 1)
    wy = (ys - y0.astype(jnp.float32))[None, :, None, None]
    wx = (xs - x0.astype(jnp.float32))[None, None, :, None]
    w_y = w[:, y0] * (1.0 - wy) + w[:, y1] * wy
    return w_y[:, :, x0] * (1.0 - wx) + w_y[:, :, x1] * wx


def flex_sf_forward(x, p):
    """Fused Flex_SF block forward (one pallas_call)."""
    B, Cin, H, W = x.shape
    HW = H * W
    OC = p["c_w"].shape[0]
    OC2, C4 = OC // 2, OC // 4

    frfi, masks = _dft_and_tap_masks(H, W)

    wk_ini = _fold_conv_weight(p["iniF_w"], p["iniF_scale"])
    wk_s1 = _fold_conv_weight(p["s1_w"], p["s1_scale"])
    wk_s2 = _fold_conv_weight(p["s2_w"], p["s2_scale"])
    wk_c = _fold_conv_weight(p["c_w"], p["c_scale"])
    b_ini = p["iniF_shift"].reshape(C4, 1).astype(jnp.float32)
    b_s1 = p["s1_shift"].reshape(OC2, 1).astype(jnp.float32)
    b_s2 = p["s2_shift"].reshape(OC2, 1).astype(jnp.float32)
    b_c = p["c_shift"].reshape(OC, 1).astype(jnp.float32)

    wcx = _interp_bilinear_align_corners(p["complex_weight"].astype(jnp.float32), H, W)
    wr = wcx[..., 0].reshape(C4, HW)
    wi = wcx[..., 1].reshape(C4, HW)

    x_flat = x.reshape(B, Cin, HW).astype(jnp.float32)

    const = lambda b: (0, 0)
    kernel = functools.partial(_flex_sf_kernel, H=H, W=W)
    out = pl.pallas_call(
        kernel,
        out_shape=jax.ShapeDtypeStruct((B, OC, HW), jnp.float32),
        grid_spec=pltpu.PrefetchScalarGridSpec(
            num_scalar_prefetch=0,
            grid=(B,),
            in_specs=[
                pl.BlockSpec((1, Cin, HW), lambda b: (b, 0, 0)),   # x (flattened)
                pl.BlockSpec((9, HW), const),                      # im2col masks
                pl.BlockSpec((HW, 2 * HW), const),                 # [fr | fi] (pre-scaled)
                pl.BlockSpec((C4, 9 * Cin), const),                # iniF weights
                pl.BlockSpec((C4, 1), const),
                pl.BlockSpec((C4, HW), const),                     # complex weight (real)
                pl.BlockSpec((C4, HW), const),                     # complex weight (imag)
                pl.BlockSpec((OC2, 9 * Cin), const),               # S conv 1
                pl.BlockSpec((OC2, 1), const),
                pl.BlockSpec((OC2, 9 * OC2), const),               # S conv 2
                pl.BlockSpec((OC2, 1), const),
                pl.BlockSpec((OC, 9 * OC), const),                 # final conv
                pl.BlockSpec((OC, 1), const),
            ],
            out_specs=pl.BlockSpec((1, OC, HW), lambda b: (b, 0, 0)),
            scratch_shapes=[
                pltpu.VMEM((9 * OC, HW), jnp.float32),   # im2col cols (largest stage)
                pltpu.VMEM((2 * C4, HW), jnp.float32),   # stacked [Re(Y); Im(Y)]
                pltpu.VMEM((OC, HW), jnp.float32),       # cat([xs, xf]) channels
            ],
        ),
        compiler_params=pltpu.CompilerParams(dimension_semantics=("parallel",)),
    )(x_flat, masks, frfi, wk_ini, b_ini, wr, wi,
      wk_s1, b_s1, wk_s2, b_s2, wk_c, b_c)
    return out.reshape(B, OC, H, W)


# ----------------------------------- SF params --------------------------------------

def init_sf_params(key, in_channels, out_channels, filter_h, filter_w):
    oc4 = out_channels // 4
    oc2 = out_channels // 2
    ks = jax.random.split(key, 8)
    eps = 1e-5
    bn_scale = 1.0 / math.sqrt(1.0 + eps)  # fresh BN (eval): mean=0, var=1, gamma=1, beta=0

    def conv_init(k, cout, cin):
        kw, kb = jax.random.split(k)
        fan_in = cin * 9
        w = jax.random.normal(kw, (cout, cin, 3, 3), jnp.float32) / math.sqrt(fan_in)
        b = jax.random.normal(kb, (cout,), jnp.float32) * 0.01
        return w, b

    p = {}
    # iniF: plain conv (no BN / ReLU)
    p["iniF_w"], p["iniF_b"] = conv_init(ks[0], oc4, in_channels)
    p["iniF_scale"] = jnp.ones((oc4,), jnp.float32)
    p["iniF_shift"] = p["iniF_b"]
    # Fourier filter complex weight: randn(F_dim, fh, fw, 2) * (1 / F_dim)
    p["complex_weight"] = (jax.random.normal(ks[1], (oc4, filter_h, filter_w, 2),
                                             jnp.float32) * (1.0 / oc4))
    # S branch: conv+BN+ReLU, conv+BN+ReLU (BN folded, eval mode)
    p["s1_w"], s1_b = conv_init(ks[2], oc2, in_channels)
    p["s1_scale"] = jnp.full((oc2,), bn_scale, jnp.float32)
    p["s1_shift"] = s1_b * bn_scale
    p["s2_w"], s2_b = conv_init(ks[3], oc2, oc2)
    p["s2_scale"] = jnp.full((oc2,), bn_scale, jnp.float32)
    p["s2_shift"] = s2_b * bn_scale
    # final conv+BN+ReLU
    p["c_w"], c_b = conv_init(ks[4], out_channels, out_channels)
    p["c_scale"] = jnp.full((out_channels,), bn_scale, jnp.float32)
    p["c_shift"] = c_b * bn_scale
    return p


# --------------------------- pure-JAX reference (f32) -------------------------------

def _reference_forward(x, p):
    def conv(x, w, scale, shift, relu):
        y = jax.lax.conv_general_dilated(
            x, w.astype(jnp.float32), (1, 1), ((1, 1), (1, 1)),
            dimension_numbers=("NCHW", "OIHW", "NCHW"),
            precision=jax.lax.Precision.HIGHEST)
        y = y * scale[None, :, None, None] + shift[None, :, None, None]
        return jnp.maximum(y, 0.0) if relu else y

    B, Cin, H, W = x.shape
    xf0 = conv(x, p["iniF_w"], p["iniF_scale"], p["iniF_shift"], False)
    wcx = _interp_bilinear_align_corners(p["complex_weight"].astype(jnp.float32), H, W)
    wc = wcx[..., 0] + 1j * wcx[..., 1]
    z = jnp.fft.ifft2(jnp.fft.fft2(xf0, norm="ortho") * wc[None], norm="ortho")
    xf = jnp.concatenate([jnp.real(z), jnp.imag(z)], axis=1)
    h = conv(x, p["s1_w"], p["s1_scale"], p["s1_shift"], True)
    xs = conv(h, p["s2_w"], p["s2_scale"], p["s2_shift"], True)
    xcat = jnp.concatenate([xs, xf], axis=1)
    return conv(xcat, p["c_w"], p["c_scale"], p["c_shift"], True)


if __name__ == "__main__":
    B, Cin, H, W = 2, 4, 16, 16
    OC = 16
    filter_h = filter_w = 8  # != (H, W): exercises the align_corners bilinear resize

    key = jax.random.PRNGKey(0)
    kx, kp = jax.random.split(key)
    x = jax.random.normal(kx, (B, Cin, H, W), jnp.float32)
    params = init_sf_params(kp, Cin, OC, filter_h, filter_w)

    out = jax.jit(flex_sf_forward)(x, params)
    out = jax.block_until_ready(out)
    assert out.shape == (B, OC, H, W), out.shape
    assert out.dtype == jnp.float32

    ref = _reference_forward(x, params)
    err = float(jnp.max(jnp.abs(out - ref)))
    assert err < 5e-2, f"max |pallas - reference| = {err}"
    print("KERNEL_OK")
</pallas_src>

<mosaic_0001>
module attributes {stable_mosaic.version = 11 : i64} {
  func.func @_flex_sf_kernel(%arg0: i32, %arg1: memref<1x4x256xf32, #tpu.memory_space<vmem>>, %arg2: memref<9x256xf32, #tpu.memory_space<vmem>>, %arg3: memref<256x512xf32, #tpu.memory_space<vmem>>, %arg4: memref<4x36xf32, #tpu.memory_space<vmem>>, %arg5: memref<4x1xf32, #tpu.memory_space<vmem>>, %arg6: memref<4x256xf32, #tpu.memory_space<vmem>>, %arg7: memref<4x256xf32, #tpu.memory_space<vmem>>, %arg8: memref<8x36xf32, #tpu.memory_space<vmem>>, %arg9: memref<8x1xf32, #tpu.memory_space<vmem>>, %arg10: memref<8x72xf32, #tpu.memory_space<vmem>>, %arg11: memref<8x1xf32, #tpu.memory_space<vmem>>, %arg12: memref<16x144xf32, #tpu.memory_space<vmem>>, %arg13: memref<16x1xf32, #tpu.memory_space<vmem>>, %arg14: memref<1x16x256xf32, #tpu.memory_space<vmem>>, %arg15: memref<144x256xf32, #tpu.memory_space<vmem>>, %arg16: memref<8x256xf32, #tpu.memory_space<vmem>>, %arg17: memref<16x256xf32, #tpu.memory_space<vmem>>) attributes {dimension_semantics = [#tpu.dimension_semantics<parallel>], iteration_bounds = array<i64: 2>, scalar_prefetch = 0 : i64, scratch_operands = 3 : i64, tpu.core_type = #tpu.core_type<tc>, window_params = [{transform_indices = @transform_0, window_bounds = array<i64: 1, 4, 256>}, {pipeline_mode = #tpu.pipeline_mode<synchronous>, transform_indices = @transform_1, window_bounds = array<i64: 9, 256>}, {pipeline_mode = #tpu.pipeline_mode<synchronous>, transform_indices = @transform_2, window_bounds = array<i64: 256, 512>}, {pipeline_mode = #tpu.pipeline_mode<synchronous>, transform_indices = @transform_3, window_bounds = array<i64: 4, 36>}, {pipeline_mode = #tpu.pipeline_mode<synchronous>, transform_indices = @transform_4, window_bounds = array<i64: 4, 1>}, {pipeline_mode = #tpu.pipeline_mode<synchronous>, transform_indices = @transform_5, window_bounds = array<i64: 4, 256>}, {pipeline_mode = #tpu.pipeline_mode<synchronous>, transform_indices = @transform_6, window_bounds = array<i64: 4, 256>}, {pipeline_mode = #tpu.pipeline_mode<synchronous>, transform_indices = @transform_7, window_bounds = array<i64: 8, 36>}, {pipeline_mode = #tpu.pipeline_mode<synchronous>, transform_indices = @transform_8, window_bounds = array<i64: 8, 1>}, {pipeline_mode = #tpu.pipeline_mode<synchronous>, transform_indices = @transform_9, window_bounds = array<i64: 8, 72>}, {pipeline_mode = #tpu.pipeline_mode<synchronous>, transform_indices = @transform_10, window_bounds = array<i64: 8, 1>}, {pipeline_mode = #tpu.pipeline_mode<synchronous>, transform_indices = @transform_11, window_bounds = array<i64: 16, 144>}, {pipeline_mode = #tpu.pipeline_mode<synchronous>, transform_indices = @transform_12, window_bounds = array<i64: 16, 1>}, {transform_indices = @transform_13, window_bounds = array<i64: 1, 16, 256>}]} {
    %c0 = arith.constant 0 : index
    %c0_0 = arith.constant 0 : index
    %0 = vector.load %arg2[%c0, %c0_0] : memref<9x256xf32, #tpu.memory_space<vmem>>, vector<9x256xf32>
    %c0_1 = arith.constant 0 : index
    %c0_2 = arith.constant 0 : index
    %c0_3 = arith.constant 0 : index
    %1 = vector.load %arg1[%c0_1, %c0_2, %c0_3] : memref<1x4x256xf32, #tpu.memory_space<vmem>>, vector<1x4x256xf32>
    %2 = vector.shape_cast %1 : vector<1x4x256xf32> to vector<4x256xf32>
    %c17_i32 = arith.constant 17 : i32
    %3 = tpu.dynamic_rotate %2 by %c17_i32 dim 1 : vector<4x256xf32>, i32 -> vector<4x256xf32>
    %4 = vector.extract_strided_slice %0 {offsets = [0, 0], sizes = [1, 256], strides = [1, 1]} : vector<9x256xf32> to vector<1x256xf32>
    %5 = vector.broadcast %4 : vector<1x256xf32> to vector<4x256xf32>
    %6 = arith.mulf %3, %5 : vector<4x256xf32>
    %c0_4 = arith.constant 0 : index
    %c0_5 = arith.constant 0 : index
    %7 = vector.load %arg15[%c0_4, %c0_5] : memref<144x256xf32, #tpu.memory_space<vmem>>, vector<4x256xf32>
    tpu.vector_store %arg15[%c0_4, %c0_5], %6 {strides = array<i32>} : memref<144x256xf32, #tpu.memory_space<vmem>>, vector<4x256xf32>,
    %c16_i32 = arith.constant 16 : i32
    %8 = tpu.dynamic_rotate %2 by %c16_i32 dim 1 : vector<4x256xf32>, i32 -> vector<4x256xf32>
    %9 = vector.extract_strided_slice %0 {offsets = [1, 0], sizes = [1, 256], strides = [1, 1]} : vector<9x256xf32> to vector<1x256xf32>
    %10 = vector.broadcast %9 : vector<1x256xf32> to vector<4x256xf32>
    %11 = arith.mulf %8, %10 : vector<4x256xf32>
    %c4 = arith.constant 4 : index
    %c0_6 = arith.constant 0 : index
    %12 = vector.load %arg15[%c4, %c0_6] : memref<144x256xf32, #tpu.memory_space<vmem>>, vector<4x256xf32>
    tpu.vector_store %arg15[%c4, %c0_6], %11 {strides = array<i32>} : memref<144x256xf32, #tpu.memory_space<vmem>>, vector<4x256xf32>,
    %c15_i32 = arith.constant 15 : i32
    %13 = tpu.dynamic_rotate %2 by %c15_i32 dim 1 : vector<4x256xf32>, i32 -> vector<4x256xf32>
    %14 = vector.extract_strided_slice %0 {offsets = [2, 0], sizes = [1, 256], strides = [1, 1]} : vector<9x256xf32> to vector<1x256xf32>
    %15 = vector.broadcast %14 : vector<1x256xf32> to vector<4x256xf32>
    %16 = arith.mulf %13, %15 : vector<4x256xf32>
    %c8 = arith.constant 8 : index
    %c0_7 = arith.constant 0 : index
    %17 = vector.load %arg15[%c8, %c0_7] : memref<144x256xf32, #tpu.memory_space<vmem>>, vector<4x256xf32>
    tpu.vector_store %arg15[%c8, %c0_7], %16 {strides = array<i32>} : memref<144x256xf32, #tpu.memory_space<vmem>>, vector<4x256xf32>,
    %c1_i32 = arith.constant 1 : i32
    %18 = tpu.dynamic_rotate %2 by %c1_i32 dim 1 : vector<4x256xf32>, i32 -> vector<4x256xf32>
    %19 = vector.extract_strided_slice %0 {offsets = [3, 0], sizes = [1, 256], strides = [1, 1]} : vector<9x256xf32> to vector<1x256xf32>
    %20 = vector.broadcast %19 : vector<1x256xf32> to vector<4x256xf32>
    %21 = arith.mulf %18, %20 : vector<4x256xf32>
    %c12 = arith.constant 12 : index
    %c0_8 = arith.constant 0 : index
    %22 = vector.load %arg15[%c12, %c0_8] : memref<144x256xf32, #tpu.memory_space<vmem>>, vector<4x256xf32>
    tpu.vector_store %arg15[%c12, %c0_8], %21 {strides = array<i32>} : memref<144x256xf32, #tpu.memory_space<vmem>>, vector<4x256xf32>,
    %23 = vector.extract_strided_slice %0 {offsets = [4, 0], sizes = [1, 256], strides = [1, 1]} : vector<9x256xf32> to vector<1x256xf32>
    %24 = vector.broadcast %23 : vector<1x256xf32> to vector<4x256xf32>
    %25 = arith.mulf %2, %24 : vector<4x256xf32>
    %c16 = arith.constant 16 : index
    %c0_9 = arith.constant 0 : index
    %26 = vector.load %arg15[%c16, %c0_9] : memref<144x256xf32, #tpu.memory_space<vmem>>, vector<4x256xf32>
    tpu.vector_store %arg15[%c16, %c0_9], %25 {strides = array<i32>} : memref<144x256xf32, #tpu.memory_space<vmem>>, vector<4x256xf32>,
    %c255_i32 = arith.constant 255 : i32
    %27 = tpu.dynamic_rotate %2 by %c255_i32 dim 1 : vector<4x256xf32>, i32 -> vector<4x256xf32>
    %28 = vector.extract_strided_slice %0 {offsets = [5, 0], sizes = [1, 256], strides = [1, 1]} : vector<9x256xf32> to vector<1x256xf32>
    %29 = vector.broadcast %28 : vector<1x256xf32> to vector<4x256xf32>
    %30 = arith.mulf %27, %29 : vector<4x256xf32>
    %c20 = arith.constant 20 : index
    %c0_10 = arith.constant 0 : index
    %31 = vector.load %arg15[%c20, %c0_10] : memref<144x256xf32, #tpu.memory_space<vmem>>, vector<4x256xf32>
    tpu.vector_store %arg15[%c20, %c0_10], %30 {strides = array<i32>} : memref<144x256xf32, #tpu.memory_space<vmem>>, vector<4x256xf32>,
    %c241_i32 = arith.constant 241 : i32
    %32 = tpu.dynamic_rotate %2 by %c241_i32 dim 1 : vector<4x256xf32>, i32 -> vector<4x256xf32>
    %33 = vector.extract_strided_slice %0 {offsets = [6, 0], sizes = [1, 256], strides = [1, 1]} : vector<9x256xf32> to vector<1x256xf32>
    %34 = vector.broadcast %33 : vector<1x256xf32> to vector<4x256xf32>
    %35 = arith.mulf %32, %34 : vector<4x256xf32>
    %c24 = arith.constant 24 : index
    %c0_11 = arith.constant 0 : index
    %36 = vector.load %arg15[%c24, %c0_11] : memref<144x256xf32, #tpu.memory_space<vmem>>, vector<4x256xf32>
    tpu.vector_store %arg15[%c24, %c0_11], %35 {strides = array<i32>} : memref<144x256xf32, #tpu.memory_space<vmem>>, vector<4x256xf32>,
    %c240_i32 = arith.constant 240 : i32
    %37 = tpu.dynamic_rotate %2 by %c240_i32 dim 1 : vector<4x256xf32>, i32 -> vector<4x256xf32>
    %38 = vector.extract_strided_slice %0 {offsets = [7, 0], sizes = [1, 256], strides = [1, 1]} : vector<9x256xf32> to vector<1x256xf32>
    %39 = vector.broadcast %38 : vector<1x256xf32> to vector<4x256xf32>
    %40 = arith.mulf %37, %39 : vector<4x256xf32>
    %c28 = arith.constant 28 : index
    %c0_12 = arith.constant 0 : index
    %41 = vector.load %arg15[%c28, %c0_12] : memref<144x256xf32, #tpu.memory_space<vmem>>, vector<4x256xf32>
    tpu.vector_store %arg15[%c28, %c0_12], %40 {strides = array<i32>} : memref<144x256xf32, #tpu.memory_space<vmem>>, vector<4x256xf32>,
    %c239_i32 = arith.constant 239 : i32
    %42 = tpu.dynamic_rotate %2 by %c239_i32 dim 1 : vector<4x256xf32>, i32 -> vector<4x256xf32>
    %43 = vector.extract_strided_slice %0 {offsets = [8, 0], sizes = [1, 256], strides = [1, 1]} : vector<9x256xf32> to vector<1x256xf32>
    %44 = vector.broadcast %43 : vector<1x256xf32> to vector<4x256xf32>
    %45 = arith.mulf %42, %44 : vector<4x256xf32>
    %c32 = arith.constant 32 : index
    %c0_13 = arith.constant 0 : index
    %46 = vector.load %arg15[%c32, %c0_13] : memref<144x256xf32, #tpu.memory_space<vmem>>, vector<4x256xf32>
    tpu.vector_store %arg15[%c32, %c0_13], %45 {strides = array<i32>} : memref<144x256xf32, #tpu.memory_space<vmem>>, vector<4x256xf32>,
    %c0_14 = arith.constant 0 : index
    %c0_15 = arith.constant 0 : index
    %47 = vector.load %arg15[%c0_14, %c0_15] : memref<144x256xf32, #tpu.memory_space<vmem>>, vector<36x256xf32>
    %c0_16 = arith.constant 0 : index
    %c0_17 = arith.constant 0 : index
    %48 = vector.load %arg4[%c0_16, %c0_17] : memref<4x36xf32, #tpu.memory_space<vmem>>, vector<4x36xf32>
    %cst = arith.constant dense<0.000000e+00> : vector<4x256xf32>
    %49 = tpu.matmul %48, %47, %cst {dimension_numbers = #tpu.dot_dimension_numbers<[1], [0], [0], [1], [0, 0, 1, 1], [], []>} : vector<4x36xf32>, vector<36x256xf32>, vector<4x256xf32> -> vector<4x256xf32>
    %c0_18 = arith.constant 0 : index
    %c0_19 = arith.constant 0 : index
    %50 = vector.load %arg5[%c0_18, %c0_19] : memref<4x1xf32, #tpu.memory_space<vmem>>, vector<4x1xf32>
    %51 = vector.broadcast %50 : vector<4x1xf32> to vector<4x256xf32>
    %52 = arith.addf %49, %51 : vector<4x256xf32>
    %c0_20 = arith.constant 0 : index
    %c0_21 = arith.constant 0 : index
    %53 = vector.load %arg8[%c0_20, %c0_21] : memref<8x36xf32, #tpu.memory_space<vmem>>, vector<8x36xf32>
    %cst_22 = arith.constant dense<0.000000e+00> : vector<8x256xf32>
    %54 = tpu.matmul %53, %47, %cst_22 {dimension_numbers = #tpu.dot_dimension_numbers<[1], [0], [0], [1], [0, 0, 1, 1], [], []>} : vector<8x36xf32>, vector<36x256xf32>, vector<8x256xf32> -> vector<8x256xf32>
    %c0_23 = arith.constant 0 : index
    %c0_24 = arith.constant 0 : index
    %55 = vector.load %arg9[%c0_23, %c0_24] : memref<8x1xf32, #tpu.memory_space<vmem>>, vector<8x1xf32>
    %56 = vector.broadcast %55 : vector<8x1xf32> to vector<8x256xf32>
    %57 = arith.addf %54, %56 : vector<8x256xf32>
    %cst_25 = arith.constant 0.000000e+00 : f32
    %58 = vector.broadcast %cst_25 : f32 to vector<8x256xf32>
    %59 = arith.maximumf %57, %58 : vector<8x256xf32>
    %c0_26 = arith.constant 0 : index
    %c0_27 = arith.constant 0 : index
    %60 = vector.load %arg3[%c0_26, %c0_27] : memref<256x512xf32, #tpu.memory_space<vmem>>, vector<256x512xf32>
    %cst_28 = arith.constant dense<0.000000e+00> : vector<4x512xf32>
    %61 = tpu.matmul %52, %60, %cst_28 {dimension_numbers = #tpu.dot_dimension_numbers<[1], [0], [0], [1], [0, 0, 1, 1], [], []>} : vector<4x256xf32>, vector<256x512xf32>, vector<4x512xf32> -> vector<4x512xf32>
    %62 = vector.extract_strided_slice %61 {offsets = [0, 0], sizes = [4, 256], strides = [1, 1]} : vector<4x512xf32> to vector<4x256xf32>
    %63 = vector.extract_strided_slice %61 {offsets = [0, 256], sizes = [4, 256], strides = [1, 1]} : vector<4x512xf32> to vector<4x256xf32>
    %c0_29 = arith.constant 0 : index
    %c0_30 = arith.constant 0 : index
    %64 = vector.load %arg6[%c0_29, %c0_30] : memref<4x256xf32, #tpu.memory_space<vmem>>, vector<4x256xf32>
    %c0_31 = arith.constant 0 : index
    %c0_32 = arith.constant 0 : index
    %65 = vector.load %arg7[%c0_31, %c0_32] : memref<4x256xf32, #tpu.memory_space<vmem>>, vector<4x256xf32>
    %66 = arith.mulf %62, %64 : vector<4x256xf32>
    %67 = arith.mulf %63, %65 : vector<4x256xf32>
    %68 = arith.subf %66, %67 : vector<4x256xf32>
    %c0_33 = arith.constant 0 : index
    %c0_34 = arith.constant 0 : index
    %69 = vector.load %arg16[%c0_33, %c0_34] : memref<8x256xf32, #tpu.memory_space<vmem>>, vector<4x256xf32>
    tpu.vector_store %arg16[%c0_33, %c0_34], %68 {strides = array<i32>} : memref<8x256xf32, #tpu.memory_space<vmem>>, vector<4x256xf32>,
    %70 = arith.mulf %62, %65 : vector<4x256xf32>
    %71 = arith.mulf %63, %64 : vector<4x256xf32>
    %72 = arith.addf %70, %71 : vector<4x256xf32>
    %c4_35 = arith.constant 4 : index
    %c0_36 = arith.constant 0 : index
    %73 = vector.load %arg16[%c4_35, %c0_36] : memref<8x256xf32, #tpu.memory_space<vmem>>, vector<4x256xf32>
    tpu.vector_store %arg16[%c4_35, %c0_36], %72 {strides = array<i32>} : memref<8x256xf32, #tpu.memory_space<vmem>>, vector<4x256xf32>,
    %c0_37 = arith.constant 0 : index
    %c0_38 = arith.constant 0 : index
    %74 = vector.load %arg16[%c0_37, %c0_38] : memref<8x256xf32, #tpu.memory_space<vmem>>, vector<8x256xf32>
    %cst_39 = arith.constant dense<0.000000e+00> : vector<8x512xf32>
    %75 = tpu.matmul %74, %60, %cst_39 {dimension_numbers = #tpu.dot_dimension_numbers<[1], [0], [0], [1], [0, 0, 1, 1], [], []>} : vector<8x256xf32>, vector<256x512xf32>, vector<8x512xf32> -> vector<8x512xf32>
    %76 = vector.extract_strided_slice %75 {offsets = [0, 0], sizes = [4, 256], strides = [1, 1]} : vector<8x512xf32> to vector<4x256xf32>
    %77 = vector.extract_strided_slice %75 {offsets = [4, 256], sizes = [4, 256], strides = [1, 1]} : vector<8x512xf32> to vector<4x256xf32>
    %78 = arith.addf %76, %77 : vector<4x256xf32>
    %79 = vector.extract_strided_slice %75 {offsets = [4, 0], sizes = [4, 256], strides = [1, 1]} : vector<8x512xf32> to vector<4x256xf32>
    %80 = vector.extract_strided_slice %75 {offsets = [0, 256], sizes = [4, 256], strides = [1, 1]} : vector<8x512xf32> to vector<4x256xf32>
    %81 = arith.subf %79, %80 : vector<4x256xf32>
    %c17_i32_40 = arith.constant 17 : i32
    %82 = tpu.dynamic_rotate %59 by %c17_i32_40 dim 1 : vector<8x256xf32>, i32 -> vector<8x256xf32>
    %83 = vector.extract_strided_slice %0 {offsets = [0, 0], sizes = [1, 256], strides = [1, 1]} : vector<9x256xf32> to vector<1x256xf32>
    %84 = vector.broadcast %83 : vector<1x256xf32> to vector<8x256xf32>
    %85 = arith.mulf %82, %84 : vector<8x256xf32>
    %c0_41 = arith.constant 0 : index
    %c0_42 = arith.constant 0 : index
    %86 = vector.load %arg15[%c0_41, %c0_42] : memref<144x256xf32, #tpu.memory_space<vmem>>, vector<8x256xf32>
    tpu.vector_store %arg15[%c0_41, %c0_42], %85 {strides = array<i32>} : memref<144x256xf32, #tpu.memory_space<vmem>>, vector<8x256xf32>,
    %c16_i32_43 = arith.constant 16 : i32
    %87 = tpu.dynamic_rotate %59 by %c16_i32_43 dim 1 : vector<8x256xf32>, i32 -> vector<8x256xf32>
    %88 = vector.extract_strided_slice %0 {offsets = [1, 0], sizes = [1, 256], strides = [1, 1]} : vector<9x256xf32> to vector<1x256xf32>
    %89 = vector.broadcast %88 : vector<1x256xf32> to vector<8x256xf32>
    %90 = arith.mulf %87, %89 : vector<8x256xf32>
    %c8_44 = arith.constant 8 : index
    %c0_45 = arith.constant 0 : index
    %91 = vector.load %arg15[%c8_44, %c0_45] : memref<144x256xf32, #tpu.memory_space<vmem>>, vector<8x256xf32>
    tpu.vector_store %arg15[%c8_44, %c0_45], %90 {strides = array<i32>} : memref<144x256xf32, #tpu.memory_space<vmem>>, vector<8x256xf32>,
    %c15_i32_46 = arith.constant 15 : i32
    %92 = tpu.dynamic_rotate %59 by %c15_i32_46 dim 1 : vector<8x256xf32>, i32 -> vector<8x256xf32>
    %93 = vector.extract_strided_slice %0 {offsets = [2, 0], sizes = [1, 256], strides = [1, 1]} : vector<9x256xf32> to vector<1x256xf32>
    %94 = vector.broadcast %93 : vector<1x256xf32> to vector<8x256xf32>
    %95 = arith.mulf %92, %94 : vector<8x256xf32>
    %c16_47 = arith.constant 16 : index
    %c0_48 = arith.constant 0 : index
    %96 = vector.load %arg15[%c16_47, %c0_48] : memref<144x256xf32, #tpu.memory_space<vmem>>, vector<8x256xf32>
    tpu.vector_store %arg15[%c16_47, %c0_48], %95 {strides = array<i32>} : memref<144x256xf32, #tpu.memory_space<vmem>>, vector<8x256xf32>,
    %c1_i32_49 = arith.constant 1 : i32
    %97 = tpu.dynamic_rotate %59 by %c1_i32_49 dim 1 : vector<8x256xf32>, i32 -> vector<8x256xf32>
    %98 = vector.extract_strided_slice %0 {offsets = [3, 0], sizes = [1, 256], strides = [1, 1]} : vector<9x256xf32> to vector<1x256xf32>
    %99 = vector.broadcast %98 : vector<1x256xf32> to vector<8x256xf32>
    %100 = arith.mulf %97, %99 : vector<8x256xf32>
    %c24_50 = arith.constant 24 : index
    %c0_51 = arith.constant 0 : index
    %101 = vector.load %arg15[%c24_50, %c0_51] : memref<144x256xf32, #tpu.memory_space<vmem>>, vector<8x256xf32>
    tpu.vector_store %arg15[%c24_50, %c0_51], %100 {strides = array<i32>} : memref<144x256xf32, #tpu.memory_space<vmem>>, vector<8x256xf32>,
    %102 = vector.extract_strided_slice %0 {offsets = [4, 0], sizes = [1, 256], strides = [1, 1]} : vector<9x256xf32> to vector<1x256xf32>
    %103 = vector.broadcast %102 : vector<1x256xf32> to vector<8x256xf32>
    %104 = arith.mulf %59, %103 : vector<8x256xf32>
    %c32_52 = arith.constant 32 : index
    %c0_53 = arith.constant 0 : index
    %105 = vector.load %arg15[%c32_52, %c0_53] : memref<144x256xf32, #tpu.memory_space<vmem>>, vector<8x256xf32>
    tpu.vector_store %arg15[%c32_52, %c0_53], %104 {strides = array<i32>} : memref<144x256xf32, #tpu.memory_space<vmem>>, vector<8x256xf32>,
    %c255_i32_54 = arith.constant 255 : i32
    %106 = tpu.dynamic_rotate %59 by %c255_i32_54 dim 1 : vector<8x256xf32>, i32 -> vector<8x256xf32>
    %107 = vector.extract_strided_slice %0 {offsets = [5, 0], sizes = [1, 256], strides = [1, 1]} : vector<9x256xf32> to vector<1x256xf32>
    %108 = vector.broadcast %107 : vector<1x256xf32> to vector<8x256xf32>
    %109 = arith.mulf %106, %108 : vector<8x256xf32>
    %c40 = arith.constant 40 : index
    %c0_55 = arith.constant 0 : index
    %110 = vector.load %arg15[%c40, %c0_55] : memref<144x256xf32, #tpu.memory_space<vmem>>, vector<8x256xf32>
    tpu.vector_store %arg15[%c40, %c0_55], %109 {strides = array<i32>} : memref<144x256xf32, #tpu.memory_space<vmem>>, vector<8x256xf32>,
    %c241_i32_56 = arith.constant 241 : i32
    %111 = tpu.dynamic_rotate %59 by %c241_i32_56 dim 1 : vector<8x256xf32>, i32 -> vector<8x256xf32>
    %112 = vector.extract_strided_slice %0 {offsets = [6, 0], sizes = [1, 256], strides = [1, 1]} : vector<9x256xf32> to vector<1x256xf32>
    %113 = vector.broadcast %112 : vector<1x256xf32> to vector<8x256xf32>
    %114 = arith.mulf %111, %113 : vector<8x256xf32>
    %c48 = arith.constant 48 : index
    %c0_57 = arith.constant 0 : index
    %115 = vector.load %arg15[%c48, %c0_57] : memref<144x256xf32, #tpu.memory_space<vmem>>, vector<8x256xf32>
    tpu.vector_store %arg15[%c48, %c0_57], %114 {strides = array<i32>} : memref<144x256xf32, #tpu.memory_space<vmem>>, vector<8x256xf32>,
    %c240_i32_58 = arith.constant 240 : i32
    %116 = tpu.dynamic_rotate %59 by %c240_i32_58 dim 1 : vector<8x256xf32>, i32 -> vector<8x256xf32>
    %117 = vector.extract_strided_slice %0 {offsets = [7, 0], sizes = [1, 256], strides = [1, 1]} : vector<9x256xf32> to vector<1x256xf32>
    %118 = vector.broadcast %117 : vector<1x256xf32> to vector<8x256xf32>
    %119 = arith.mulf %116, %118 : vector<8x256xf32>
    %c56 = arith.constant 56 : index
    %c0_59 = arith.constant 0 : index
    %120 = vector.load %arg15[%c56, %c0_59] : memref<144x256xf32, #tpu.memory_space<vmem>>, vector<8x256xf32>
    tpu.vector_store %arg15[%c56, %c0_59], %119 {strides = array<i32>} : memref<144x256xf32, #tpu.memory_space<vmem>>, vector<8x256xf32>,
    %c239_i32_60 = arith.constant 239 : i32
    %121 = tpu.dynamic_rotate %59 by %c239_i32_60 dim 1 : vector<8x256xf32>, i32 -> vector<8x256xf32>
    %122 = vector.extract_strided_slice %0 {offsets = [8, 0], sizes = [1, 256], strides = [1, 1]} : vector<9x256xf32> to vector<1x256xf32>
    %123 = vector.broadcast %122 : vector<1x256xf32> to vector<8x256xf32>
    %124 = arith.mulf %121, %123 : vector<8x256xf32>
    %c64 = arith.constant 64 : index
    %c0_61 = arith.constant 0 : index
    %125 = vector.load %arg15[%c64, %c0_61] : memref<144x256xf32, #tpu.memory_space<vmem>>, vector<8x256xf32>
    tpu.vector_store %arg15[%c64, %c0_61], %124 {strides = array<i32>} : memref<144x256xf32, #tpu.memory_space<vmem>>, vector<8x256xf32>,
    %c0_62 = arith.constant 0 : index
    %c0_63 = arith.constant 0 : index
    %126 = vector.load %arg15[%c0_62, %c0_63] : memref<144x256xf32, #tpu.memory_space<vmem>>, vector<72x256xf32>
    %c0_64 = arith.constant 0 : index
    %c0_65 = arith.constant 0 : index
    %127 = vector.load %arg10[%c0_64, %c0_65] : memref<8x72xf32, #tpu.memory_space<vmem>>, vector<8x72xf32>
    %cst_66 = arith.constant dense<0.000000e+00> : vector<8x256xf32>
    %128 = tpu.matmul %127, %126, %cst_66 {dimension_numbers = #tpu.dot_dimension_numbers<[1], [0], [0], [1], [0, 0, 1, 1], [], []>} : vector<8x72xf32>, vector<72x256xf32>, vector<8x256xf32> -> vector<8x256xf32>
    %c0_67 = arith.constant 0 : index
    %c0_68 = arith.constant 0 : index
    %129 = vector.load %arg11[%c0_67, %c0_68] : memref<8x1xf32, #tpu.memory_space<vmem>>, vector<8x1xf32>
    %130 = vector.broadcast %129 : vector<8x1xf32> to vector<8x256xf32>
    %131 = arith.addf %128, %130 : vector<8x256xf32>
    %cst_69 = arith.constant 0.000000e+00 : f32
    %132 = vector.broadcast %cst_69 : f32 to vector<8x256xf32>
    %133 = arith.maximumf %131, %132 : vector<8x256xf32>
    %c0_70 = arith.constant 0 : index
    %c0_71 = arith.constant 0 : index
    %134 = vector.load %arg17[%c0_70, %c0_71] : memref<16x256xf32, #tpu.memory_space<vmem>>, vector<8x256xf32>
    tpu.vector_store %arg17[%c0_70, %c0_71], %133 {strides = array<i32>} : memref<16x256xf32, #tpu.memory_space<vmem>>, vector<8x256xf32>,
    %c8_72 = arith.constant 8 : index
    %c0_73 = arith.constant 0 : index
    %135 = vector.load %arg17[%c8_72, %c0_73] : memref<16x256xf32, #tpu.memory_space<vmem>>, vector<4x256xf32>
    tpu.vector_store %arg17[%c8_72, %c0_73], %78 {strides = array<i32>} : memref<16x256xf32, #tpu.memory_space<vmem>>, vector<4x256xf32>,
    %c12_74 = arith.constant 12 : index
    %c0_75 = arith.constant 0 : index
    %136 = vector.load %arg17[%c12_74, %c0_75] : memref<16x256xf32, #tpu.memory_space<vmem>>, vector<4x256xf32>
    tpu.vector_store %arg17[%c12_74, %c0_75], %81 {strides = array<i32>} : memref<16x256xf32, #tpu.memory_space<vmem>>, vector<4x256xf32>,
    %c0_76 = arith.constant 0 : index
    %c0_77 = arith.constant 0 : index
    %137 = vector.load %arg17[%c0_76, %c0_77] : memref<16x256xf32, #tpu.memory_space<vmem>>, vector<16x256xf32>
    %c17_i32_78 = arith.constant 17 : i32
    %138 = tpu.dynamic_rotate %137 by %c17_i32_78 dim 1 : vector<16x256xf32>, i32 -> vector<16x256xf32>
    %139 = vector.extract_strided_slice %0 {offsets = [0, 0], sizes = [1, 256], strides = [1, 1]} : vector<9x256xf32> to vector<1x256xf32>
    %140 = vector.broadcast %139 : vector<1x256xf32> to vector<16x256xf32>
    %141 = arith.mulf %138, %140 : vector<16x256xf32>
    %c0_79 = arith.constant 0 : index
    %c0_80 = arith.constant 0 : index
    %142 = vector.load %arg15[%c0_79, %c0_80] : memref<144x256xf32, #tpu.memory_space<vmem>>, vector<16x256xf32>
    tpu.vector_store %arg15[%c0_79, %c0_80], %141 {strides = array<i32>} : memref<144x256xf32, #tpu.memory_space<vmem>>, vector<16x256xf32>,
    %c16_i32_81 = arith.constant 16 : i32
    %143 = tpu.dynamic_rotate %137 by %c16_i32_81 dim 1 : vector<16x256xf32>, i32 -> vector<16x256xf32>
    %144 = vector.extract_strided_slice %0 {offsets = [1, 0], sizes = [1, 256], strides = [1, 1]} : vector<9x256xf32> to vector<1x256xf32>
    %145 = vector.broadcast %144 : vector<1x256xf32> to vector<16x256xf32>
    %146 = arith.mulf %143, %145 : vector<16x256xf32>
    %c16_82 = arith.constant 16 : index
    %c0_83 = arith.constant 0 : index
    %147 = vector.load %arg15[%c16_82, %c0_83] : memref<144x256xf32, #tpu.memory_space<vmem>>, vector<16x256xf32>
    tpu.vector_store %arg15[%c16_82, %c0_83], %146 {strides = array<i32>} : memref<144x256xf32, #tpu.memory_space<vmem>>, vector<16x256xf32>,
    %c15_i32_84 = arith.constant 15 : i32
    %148 = tpu.dynamic_rotate %137 by %c15_i32_84 dim 1 : vector<16x256xf32>, i32 -> vector<16x256xf32>
    %149 = vector.extract_strided_slice %0 {offsets = [2, 0], sizes = [1, 256], strides = [1, 1]} : vector<9x256xf32> to vector<1x256xf32>
    %150 = vector.broadcast %149 : vector<1x256xf32> to vector<16x256xf32>
    %151 = arith.mulf %148, %150 : vector<16x256xf32>
    %c32_85 = arith.constant 32 : index
    %c0_86 = arith.constant 0 : index
    %152 = vector.load %arg15[%c32_85, %c0_86] : memref<144x256xf32, #tpu.memory_space<vmem>>, vector<16x256xf32>
    tpu.vector_store %arg15[%c32_85, %c0_86], %151 {strides = array<i32>} : memref<144x256xf32, #tpu.memory_space<vmem>>, vector<16x256xf32>,
    %c1_i32_87 = arith.constant 1 : i32
    %153 = tpu.dynamic_rotate %137 by %c1_i32_87 dim 1 : vector<16x256xf32>, i32 -> vector<16x256xf32>
    %154 = vector.extract_strided_slice %0 {offsets = [3, 0], sizes = [1, 256], strides = [1, 1]} : vector<9x256xf32> to vector<1x256xf32>
    %155 = vector.broadcast %154 : vector<1x256xf32> to vector<16x256xf32>
    %156 = arith.mulf %153, %155 : vector<16x256xf32>
    %c48_88 = arith.constant 48 : index
    %c0_89 = arith.constant 0 : index
    %157 = vector.load %arg15[%c48_88, %c0_89] : memref<144x256xf32, #tpu.memory_space<vmem>>, vector<16x256xf32>
    tpu.vector_store %arg15[%c48_88, %c0_89], %156 {strides = array<i32>} : memref<144x256xf32, #tpu.memory_space<vmem>>, vector<16x256xf32>,
    %158 = vector.extract_strided_slice %0 {offsets = [4, 0], sizes = [1, 256], strides = [1, 1]} : vector<9x256xf32> to vector<1x256xf32>
    %159 = vector.broadcast %158 : vector<1x256xf32> to vector<16x256xf32>
    %160 = arith.mulf %137, %159 : vector<16x256xf32>
    %c64_90 = arith.constant 64 : index
    %c0_91 = arith.constant 0 : index
    %161 = vector.load %arg15[%c64_90, %c0_91] : memref<144x256xf32, #tpu.memory_space<vmem>>, vector<16x256xf32>
    tpu.vector_store %arg15[%c64_90, %c0_91], %160 {strides = array<i32>} : memref<144x256xf32, #tpu.memory_space<vmem>>, vector<16x256xf32>,
    %c255_i32_92 = arith.constant 255 : i32
    %162 = tpu.dynamic_rotate %137 by %c255_i32_92 dim 1 : vector<16x256xf32>, i32 -> vector<16x256xf32>
    %163 = vector.extract_strided_slice %0 {offsets = [5, 0], sizes = [1, 256], strides = [1, 1]} : vector<9x256xf32> to vector<1x256xf32>
    %164 = vector.broadcast %163 : vector<1x256xf32> to vector<16x256xf32>
    %165 = arith.mulf %162, %164 : vector<16x256xf32>
    %c80 = arith.constant 80 : index
    %c0_93 = arith.constant 0 : index
    %166 = vector.load %arg15[%c80, %c0_93] : memref<144x256xf32, #tpu.memory_space<vmem>>, vector<16x256xf32>
    tpu.vector_store %arg15[%c80, %c0_93], %165 {strides = array<i32>} : memref<144x256xf32, #tpu.memory_space<vmem>>, vector<16x256xf32>,
    %c241_i32_94 = arith.constant 241 : i32
    %167 = tpu.dynamic_rotate %137 by %c241_i32_94 dim 1 : vector<16x256xf32>, i32 -> vector<16x256xf32>
    %168 = vector.extract_strided_slice %0 {offsets = [6, 0], sizes = [1, 256], strides = [1, 1]} : vector<9x256xf32> to vector<1x256xf32>
    %169 = vector.broadcast %168 : vector<1x256xf32> to vector<16x256xf32>
    %170 = arith.mulf %167, %169 : vector<16x256xf32>
    %c96 = arith.constant 96 : index
    %c0_95 = arith.constant 0 : index
    %171 = vector.load %arg15[%c96, %c0_95] : memref<144x256xf32, #tpu.memory_space<vmem>>, vector<16x256xf32>
    tpu.vector_store %arg15[%c96, %c0_95], %170 {strides = array<i32>} : memref<144x256xf32, #tpu.memory_space<vmem>>, vector<16x256xf32>,
    %c240_i32_96 = arith.constant 240 : i32
    %172 = tpu.dynamic_rotate %137 by %c240_i32_96 dim 1 : vector<16x256xf32>, i32 -> vector<16x256xf32>
    %173 = vector.extract_strided_slice %0 {offsets = [7, 0], sizes = [1, 256], strides = [1, 1]} : vector<9x256xf32> to vector<1x256xf32>
    %174 = vector.broadcast %173 : vector<1x256xf32> to vector<16x256xf32>
    %175 = arith.mulf %172, %174 : vector<16x256xf32>
    %c112 = arith.constant 112 : index
    %c0_97 = arith.constant 0 : index
    %176 = vector.load %arg15[%c112, %c0_97] : memref<144x256xf32, #tpu.memory_space<vmem>>, vector<16x256xf32>
    tpu.vector_store %arg15[%c112, %c0_97], %175 {strides = array<i32>} : memref<144x256xf32, #tpu.memory_space<vmem>>, vector<16x256xf32>,
    %c239_i32_98 = arith.constant 239 : i32
    %177 = tpu.dynamic_rotate %137 by %c239_i32_98 dim 1 : vector<16x256xf32>, i32 -> vector<16x256xf32>
    %178 = vector.extract_strided_slice %0 {offsets = [8, 0], sizes = [1, 256], strides = [1, 1]} : vector<9x256xf32> to vector<1x256xf32>
    %179 = vector.broadcast %178 : vector<1x256xf32> to vector<16x256xf32>
    %180 = arith.mulf %177, %179 : vector<16x256xf32>
    %c128 = arith.constant 128 : index
    %c0_99 = arith.constant 0 : index
    %181 = vector.load %arg15[%c128, %c0_99] : memref<144x256xf32, #tpu.memory_space<vmem>>, vector<16x256xf32>
    tpu.vector_store %arg15[%c128, %c0_99], %180 {strides = array<i32>} : memref<144x256xf32, #tpu.memory_space<vmem>>, vector<16x256xf32>,
    %c0_100 = arith.constant 0 : index
    %c0_101 = arith.constant 0 : index
    %182 = vector.load %arg15[%c0_100, %c0_101] : memref<144x256xf32, #tpu.memory_space<vmem>>, vector<144x256xf32>
    %c0_102 = arith.constant 0 : index
    %c0_103 = arith.constant 0 : index
    %183 = vector.load %arg12[%c0_102, %c0_103] : memref<16x144xf32, #tpu.memory_space<vmem>>, vector<16x144xf32>
    %cst_104 = arith.constant dense<0.000000e+00> : vector<16x256xf32>
    %184 = tpu.matmul %183, %182, %cst_104 {dimension_numbers = #tpu.dot_dimension_numbers<[1], [0], [0], [1], [0, 0, 1, 1], [], []>} : vector<16x144xf32>, vector<144x256xf32>, vector<16x256xf32> -> vector<16x256xf32>
    %c0_105 = arith.constant 0 : index
    %c0_106 = arith.constant 0 : index
    %185 = vector.load %arg13[%c0_105, %c0_106] : memref<16x1xf32, #tpu.memory_space<vmem>>, vector<16x1xf32>
    %186 = vector.broadcast %185 : vector<16x1xf32> to vector<16x256xf32>
    %187 = arith.addf %184, %186 : vector<16x256xf32>
    %cst_107 = arith.constant 0.000000e+00 : f32
    %188 = vector.broadcast %cst_107 : f32 to vector<16x256xf32>
    %189 = arith.maximumf %187, %188 : vector<16x256xf32>
    %c0_108 = arith.constant 0 : index
    %c0_109 = arith.constant 0 : index
    %c0_110 = arith.constant 0 : index
    %190 = vector.load %arg14[%c0_108, %c0_109, %c0_110] : memref<1x16x256xf32, #tpu.memory_space<vmem>>, vector<1x16x256xf32>
    %191 = vector.shape_cast %190 : vector<1x16x256xf32> to vector<16x256xf32>
    %192 = vector.shape_cast %189 : vector<16x256xf32> to vector<1x16x256xf32>
    tpu.vector_store %arg14[%c0_108, %c0_109, %c0_110], %192 {strides = array<i32>} : memref<1x16x256xf32, #tpu.memory_space<vmem>>, vector<1x16x256xf32>,
    return
  }
  func.func @transform_0(%arg0: i32) -> (i32, i32, i32) {
    %c0_i32 = arith.constant 0 : i32
    %c0_i32_0 = arith.constant 0 : i32
    %c0_i32_1 = arith.constant 0 : i32
    return %arg0, %c0_i32, %c0_i32_0 : i32, i32, i32
  }
  func.func @transform_1(%arg0: i32) -> (i32, i32) {
    %c0_i32 = arith.constant 0 : i32
    %c0_i32_0 = arith.constant 0 : i32
    %c0_i32_1 = arith.constant 0 : i32
    return %c0_i32, %c0_i32_0 : i32, i32
  }
  func.func @transform_2(%arg0: i32) -> (i32, i32) {
    %c0_i32 = arith.constant 0 : i32
    %c0_i32_0 = arith.constant 0 : i32
    %c0_i32_1 = arith.constant 0 : i32
    return %c0_i32, %c0_i32_0 : i32, i32
  }
  func.func @transform_3(%arg0: i32) -> (i32, i32) {
    %c0_i32 = arith.constant 0 : i32
    %c0_i32_0 = arith.constant 0 : i32
    %c0_i32_1 = arith.constant 0 : i32
    return %c0_i32, %c0_i32_0 : i32, i32
  }
  func.func @transform_4(%arg0: i32) -> (i32, i32) {
    %c0_i32 = arith.constant 0 : i32
    %c0_i32_0 = arith.constant 0 : i32
    %c0_i32_1 = arith.constant 0 : i32
    return %c0_i32, %c0_i32_0 : i32, i32
  }
  func.func @transform_5(%arg0: i32) -> (i32, i32) {
    %c0_i32 = arith.constant 0 : i32
    %c0_i32_0 = arith.constant 0 : i32
    %c0_i32_1 = arith.constant 0 : i32
    return %c0_i32, %c0_i32_0 : i32, i32
  }
  func.func @transform_6(%arg0: i32) -> (i32, i32) {
    %c0_i32 = arith.constant 0 : i32
    %c0_i32_0 = arith.constant 0 : i32
    %c0_i32_1 = arith.constant 0 : i32
    return %c0_i32, %c0_i32_0 : i32, i32
  }
  func.func @transform_7(%arg0: i32) -> (i32, i32) {
    %c0_i32 = arith.constant 0 : i32
    %c0_i32_0 = arith.constant 0 : i32
    %c0_i32_1 = arith.constant 0 : i32
    return %c0_i32, %c0_i32_0 : i32, i32
  }
  func.func @transform_8(%arg0: i32) -> (i32, i32) {
    %c0_i32 = arith.constant 0 : i32
    %c0_i32_0 = arith.constant 0 : i32
    %c0_i32_1 = arith.constant 0 : i32
    return %c0_i32, %c0_i32_0 : i32, i32
  }
  func.func @transform_9(%arg0: i32) -> (i32, i32) {
    %c0_i32 = arith.constant 0 : i32
    %c0_i32_0 = arith.constant 0 : i32
    %c0_i32_1 = arith.constant 0 : i32
    return %c0_i32, %c0_i32_0 : i32, i32
  }
  func.func @transform_10(%arg0: i32) -> (i32, i32) {
    %c0_i32 = arith.constant 0 : i32
    %c0_i32_0 = arith.constant 0 : i32
    %c0_i32_1 = arith.constant 0 : i32
    return %c0_i32, %c0_i32_0 : i32, i32
  }
  func.func @transform_11(%arg0: i32) -> (i32, i32) {
    %c0_i32 = arith.constant 0 : i32
    %c0_i32_0 = arith.constant 0 : i32
    %c0_i32_1 = arith.constant 0 : i32
    return %c0_i32, %c0_i32_0 : i32, i32
  }
  func.func @transform_12(%arg0: i32) -> (i32, i32) {
    %c0_i32 = arith.constant 0 : i32
    %c0_i32_0 = arith.constant 0 : i32
    %c0_i32_1 = arith.constant 0 : i32
    return %c0_i32, %c0_i32_0 : i32, i32
  }
  func.func @transform_13(%arg0: i32) -> (i32, i32, i32) {
    %c0_i32 = arith.constant 0 : i32
    %c0_i32_0 = arith.constant 0 : i32
    %c0_i32_1 = arith.constant 0 : i32
    return %arg0, %c0_i32, %c0_i32_0 : i32, i32, i32
  }
}

</mosaic_0001>

<llo_original>
// kernel: squeeze.3
$region0: #{squeeze.3}
  %s0 = inlined_call_operand.vmem [shape: f32[4,16,16,1], index: 0, kind: input, shape index: {}]
  %s1 = inlined_call_operand.vmem [shape: f32[4,256], index: 1, kind: output, shape index: {}]
  $region1: #{squeeze.3} parent=0
    #allocation0 [shape = 'u8[8192]{0}', space=vmem, size = 0x2000, scoped, tag = 'scoped mem for output reshape']
    %v2 = vld [vmem:[%s0] ss:$8 sm:$0xf]
    %v3 = vld [vmem:[%s0] ss:$8 sm:$0xf0]
    %vm4 = vcmask 1047556
    %v5 = vsel %vm4, %v3, %v2
    %vm6 = vcmask 130048
    %7 = vst.msk [vmem:[#allocation0] ss:$8 sm:$0x3] %vm6, %v5
    %s8 = scalar_lea.vmem [#allocation0], 4294967281
    %9 = vst.msk [vmem:[%s8] ss:$8 sm:$0xc] %vm6, %v5
    %s10 = scalar_lea.vmem [#allocation0], 4294967266
    %11 = vst.msk [vmem:[%s10] ss:$8 sm:$0x30] %vm6, %v5
    %s12 = scalar_lea.vmem [#allocation0], 4294967251
    %13 = vst.msk [vmem:[%s12] ss:$8 sm:$0xc0] %vm6, %v5
    %s14 = scalar_lea.vmem %s0, 7
    %s15 = smov 3
    %v16 = vld [vmem:[%s14] ss:$16 sm:%s15]
    %s17 = scalar_lea.vmem %s0, 7
    %s18 = smov 12
    %v19 = vld [vmem:[%s17] ss:$16 sm:%s18]
    %vm20 = vcmask 1043458
    %v21 = vsel %vm20, %v19, %v16
    %s22 = scalar_lea.vmem %s0, 4294967247
    %s23 = smov 48
    %v24 = vld [vmem:[%s22] ss:$16 sm:%s23]
    %vm25 = vcmask 1045508
    %v26 = vsel %vm25, %v24, %v21
    %s27 = scalar_lea.vmem %s0, 4294967247
    %s28 = smov 192
    %v29 = vld [vmem:[%s27] ss:$16 sm:%s28]
    %vm30 = vcmask 1047558
    %v31 = vsel %vm30, %v29, %v26
    %32 = vrot.lane.b32.xlu0 %v31, 112
    %v33 = vpop.permute.xlu0 %32
    %vm34 = vcmask 1048448
    %35 = vst.msk [vmem:[#allocation0] sm:$0xf] %vm34, %v33
    %s36 = scalar_lea.vmem [#allocation0], 4
    %37 = vst.msk [vmem:[%s36] sm:$0xf0] %vm34, %v33
    %s38 = scalar_lea.vmem %s0, 6
    %s39 = smov 3
    %v40 = vld [vmem:[%s38] ss:$16 sm:%s39]
    %s41 = scalar_lea.vmem %s0, 6
    %s42 = smov 12
    %v43 = vld [vmem:[%s41] ss:$16 sm:%s42]
    %vm44 = vcmask 1043458
    %v45 = vsel %vm44, %v43, %v40
    %s46 = scalar_lea.vmem %s0, 4294967246
    %s47 = smov 48
    %v48 = vld [vmem:[%s46] ss:$16 sm:%s47]
    %vm49 = vcmask 1045508
    %v50 = vsel %vm49, %v48, %v45
    %s51 = scalar_lea.vmem %s0, 4294967246
    %s52 = smov 192
    %v53 = vld [vmem:[%s51] ss:$16 sm:%s52]
    %vm54 = vcmask 1047558
    %v55 = vsel %vm54, %v53, %v50
    %56 = vrot.lane.b32.xlu0 %v55, 96
    %v57 = vpop.permute.xlu0 %56
    %vm58 = vcmask 917248
    %59 = vst.msk [vmem:[#allocation0] sm:$0xf] %vm58, %v57
    %s60 = scalar_lea.vmem [#allocation0], 4
    %61 = vst.msk [vmem:[%s60] sm:$0xf0] %vm58, %v57
    %s62 = scalar_lea.vmem %s0, 5
    %s63 = smov 3
    %v64 = vld [vmem:[%s62] ss:$16 sm:%s63]
    %s65 = scalar_lea.vmem %s0, 5
    %s66 = smov 12
    %v67 = vld [vmem:[%s65] ss:$16 sm:%s66]
    %vm68 = vcmask 1043458
    %v69 = vsel %vm68, %v67, %v64
    %s70 = scalar_lea.vmem %s0, 4294967245
    %s71 = smov 48
    %v72 = vld [vmem:[%s70] ss:$16 sm:%s71]
    %vm73 = vcmask 1045508
    %v74 = vsel %vm73, %v72, %v69
    %s75 = scalar_lea.vmem %s0, 4294967245
    %s76 = smov 192
    %v77 = vld [vmem:[%s75] ss:$16 sm:%s76]
    %vm78 = vcmask 1047558
    %v79 = vsel %vm78, %v77, %v74
    %80 = vrot.lane.b32.xlu0 %v79, 80
    %v81 = vpop.permute.xlu0 %80
    %vm82 = vcmask 786048
    %83 = vst.msk [vmem:[#allocation0] sm:$0xf] %vm82, %v81
    %s84 = scalar_lea.vmem [#allocation0], 4
    %85 = vst.msk [vmem:[%s84] sm:$0xf0] %vm82, %v81
    %s86 = scalar_lea.vmem %s0, 4
    %s87 = smov 3
    %v88 = vld [vmem:[%s86] ss:$16 sm:%s87]
    %s89 = scalar_lea.vmem %s0, 4
    %s90 = smov 12
    %v91 = vld [vmem:[%s89] ss:$16 sm:%s90]
    %vm92 = vcmask 1043458
    %v93 = vsel %vm92, %v91, %v88
    %s94 = scalar_lea.vmem %s0, 4294967244
    %s95 = smov 48
    %v96 = vld [vmem:[%s94] ss:$16 sm:%s95]
    %vm97 = vcmask 1045508
    %v98 = vsel %vm97, %v96, %v93
    %s99 = scalar_lea.vmem %s0, 4294967244
    %s100 = smov 192
    %v101 = vld [vmem:[%s99] ss:$16 sm:%s100]
    %vm102 = vcmask 1047558
    %v103 = vsel %vm102, %v101, %v98
    %104 = vrot.lane.b32.xlu0 %v103, 64
    %v105 = vpop.permute.xlu0 %104
    %vm106 = vcmask 654848
    %107 = vst.msk [vmem:[#allocation0] sm:$0xf] %vm106, %v105
    %s108 = scalar_lea.vmem [#allocation0], 4
    %109 = vst.msk [vmem:[%s108] sm:$0xf0] %vm106, %v105
    %s110 = scalar_lea.vmem %s0, 3
    %s111 = smov 3
    %v112 = vld [vmem:[%s110] ss:$16 sm:%s111]
    %s113 = scalar_lea.vmem %s0, 3
    %s114 = smov 12
    %v115 = vld [vmem:[%s113] ss:$16 sm:%s114]
    %vm116 = vcmask 1043458
    %v117 = vsel %vm116, %v115, %v112
    %s118 = scalar_lea.vmem %s0, 4294967243
    %s119 = smov 48
    %v120 = vld [vmem:[%s118] ss:$16 sm:%s119]
    %vm121 = vcmask 1045508
    %v122 = vsel %vm121, %v120, %v117
    %s123 = scalar_lea.vmem %s0, 4294967243
    %s124 = smov 192
    %v125 = vld [vmem:[%s123] ss:$16 sm:%s124]
    %vm126 = vcmask 1047558
    %v127 = vsel %vm126, %v125, %v122
    %128 = vrot.lane.b32.xlu0 %v127, 48
    %v129 = vpop.permute.xlu0 %128
    %vm130 = vcmask 523648
    %131 = vst.msk [vmem:[#allocation0] sm:$0xf] %vm130, %v129
    %s132 = scalar_lea.vmem [#allocation0], 4
    %133 = vst.msk [vmem:[%s132] sm:$0xf0] %vm130, %v129
    %s134 = scalar_lea.vmem %s0, 2
    %s135 = smov 3
    %v136 = vld [vmem:[%s134] ss:$16 sm:%s135]
    %s137 = scalar_lea.vmem %s0, 2
    %s138 = smov 12
    %v139 = vld [vmem:[%s137] ss:$16 sm:%s138]
    %vm140 = vcmask 1043458
    %v141 = vsel %vm140, %v139, %v136
    %s142 = scalar_lea.vmem %s0, 4294967242
    %s143 = smov 48
    %v144 = vld [vmem:[%s142] ss:$16 sm:%s143]
    %vm145 = vcmask 1045508
    %v146 = vsel %vm145, %v144, %v141
    %s147 = scalar_lea.vmem %s0, 4294967242
    %s148 = smov 192
    %v149 = vld [vmem:[%s147] ss:$16 sm:%s148]
    %vm150 = vcmask 1047558
    %v151 = vsel %vm150, %v149, %v146
    %152 = vrot.lane.b32.xlu0 %v151, 32
    %v153 = vpop.permute.xlu0 %152
    %vm154 = vcmask 392448
    %155 = vst.msk [vmem:[#allocation0] sm:$0xf] %vm154, %v153
    %s156 = scalar_lea.vmem [#allocation0], 4
    %157 = vst.msk [vmem:[%s156] sm:$0xf0] %vm154, %v153
    %s158 = scalar_lea.vmem %s0, 1
    %s159 = smov 3
    %v160 = vld [vmem:[%s158] ss:$16 sm:%s159]
    %s161 = scalar_lea.vmem %s0, 1
    %s162 = smov 12
    %v163 = vld [vmem:[%s161] ss:$16 sm:%s162]
    %vm164 = vcmask 1043458
    %v165 = vsel %vm164, %v163, %v160
    %s166 = scalar_lea.vmem %s0, 4294967241
    %s167 = smov 48
    %v168 = vld [vmem:[%s166] ss:$16 sm:%s167]
    %vm169 = vcmask 1045508
    %v170 = vsel %vm169, %v168, %v165
    %s171 = scalar_lea.vmem %s0, 4294967241
    %s172 = smov 192
    %v173 = vld [vmem:[%s171] ss:$16 sm:%s172]
    %vm174 = vcmask 1047558
    %v175 = vsel %vm174, %v173, %v170
    %176 = vrot.lane.b32.xlu0 %v175, 16
    %v177 = vpop.permute.xlu0 %176
    %vm178 = vcmask 261248
    %179 = vst.msk [vmem:[#allocation0] sm:$0xf] %vm178, %v177
    %s180 = scalar_lea.vmem [#allocation0], 4
    %181 = vst.msk [vmem:[%s180] sm:$0xf0] %vm178, %v177
    %s183 = sshllo.u32 0, 4
    %v185 = vld [vmem:[#allocation0] sm:%s183]
    %s186 = sshllo.u32 0, 4
    %187 = vst [vmem:[%s1] sm:%s186] %v185
    %s188 = scalar_lea.vmem [#allocation0], 8
    %v189 = vld [vmem:[%s188] sm:%s183]
    %s190 = sshllo.u32 0, 4
    %s191 = scalar_lea.vmem %s1, 4
    %192 = vst [vmem:[%s191] sm:%s190] %v189

// kernel: flex_sf_forward.1
$region0: #{flex_sf_forward.1}
  #allocation0 [shape = 'u32[]', space=smem, size = 0x4, offset = 0x4, fixed_abs, tag = 'smem constant byte address 0x4 - core index']
  #allocation1 [shape = 'u32[144,128]{1,0:T(1,128)}', space=vmem, size = 0x12000, scoped, tag = 'internal scratch']
  #allocation2 [shape = 'f32[144,256]{1,0:T(8,128)}', space=vmem, size = 0x24000, scoped, tag = 'scratch operand']
  #allocation3 [shape = 'f32[8,256]{1,0:T(8,128)}', space=vmem, size = 0x2000, scoped, tag = 'scratch operand']
  #allocation4 [shape = 'f32[16,256]{1,0:T(8,128)}', space=vmem, size = 0x4000, scoped, tag = 'scratch operand']
  %s0 = inlined_call_operand.vmem [shape: f32[2,4,256], index: 0, kind: input, shape index: {}]
  %s1 = inlined_call_operand.vmem [shape: f32[9,256], index: 1, kind: input, shape index: {}]
  %s2 = inlined_call_operand.vmem [shape: f32[256,512], index: 2, kind: input, shape index: {}]
  %s3 = inlined_call_operand.vmem [shape: f32[4,36], index: 3, kind: input, shape index: {}]
  %s4 = inlined_call_operand.vmem [shape: f32[4,1], index: 4, kind: input, shape index: {}]
  %s5 = inlined_call_operand.vmem [shape: f32[4,256], index: 5, kind: input, shape index: {}]
  %s6 = inlined_call_operand.vmem [shape: f32[4,256], index: 6, kind: input, shape index: {}]
  %s7 = inlined_call_operand.vmem [shape: f32[8,36], index: 7, kind: input, shape index: {}]
  %s8 = inlined_call_operand.vmem [shape: f32[8,1], index: 8, kind: input, shape index: {}]
  %s9 = inlined_call_operand.vmem [shape: f32[8,72], index: 9, kind: input, shape index: {}]
  %s10 = inlined_call_operand.vmem [shape: f32[8,1], index: 10, kind: input, shape index: {}]
  %s11 = inlined_call_operand.vmem [shape: f32[16,144], index: 11, kind: input, shape index: {}]
  %s12 = inlined_call_operand.vmem [shape: f32[16,1], index: 12, kind: input, shape index: {}]
  %s13 = inlined_call_operand.vmem [shape: f32[2,16,256], index: 13, kind: output, shape index: {}]
  %s14 = sld [smem:[#allocation0]]
  $region85: #{flex_sf_forward.1} parent=0
    _
  %s16 = ssub.s32 1, %s14
  %s17 = scalar_select 0, %s16, %s14
  loop: start=0, step=1, limit=4
  $region2: #{flex_sf_forward.1} parent=0 // loop_pre_header
    _
  $region3: #{flex_sf_forward.1} parent=0 // loop_header
    %s19 = sphi 0, %s23
    %p20 = scmp.ge.s32.totalorder %s19, 4
    %s29 = sphi 0, %s31
    %s32 = sphi 0, %s29
    %s33 = sphi 0, %s32
    %s49 = sphi 0, %s33
    %s53 = sphi 0, %s53
    %s55 = sphi 0, %s53
    %s56 = sphi 0, %s55
    %s70 = sphi 0, %s56
    %s74 = sphi 0, %s74
    %s76 = sphi 0, %s74
    %s77 = sphi 0, %s76
    %s91 = sphi 0, %s77
    %s95 = sphi 0, %s95
    %s97 = sphi 0, %s95
    %s98 = sphi 0, %s97
    %s112 = sphi 0, %s98
    %s116 = sphi 0, %s116
    %s118 = sphi 0, %s116
    %s119 = sphi 0, %s118
    %s133 = sphi 0, %s119
    %s137 = sphi 0, %s137
    %s139 = sphi 0, %s137
    %s140 = sphi 0, %s139
    %s154 = sphi 0, %s140
    %s158 = sphi 0, %s158
    %s160 = sphi 0, %s158
    %s161 = sphi 0, %s160
    %s175 = sphi 0, %s161
    %s179 = sphi 0, %s179
    %s181 = sphi 0, %s179
    %s182 = sphi 0, %s181
    %s196 = sphi 0, %s182
    %s200 = sphi 0, %s200
    %s202 = sphi 0, %s200
    %s203 = sphi 0, %s202
    %s217 = sphi 0, %s203
    %s221 = sphi 0, %s221
    %s223 = sphi 0, %s221
    %s224 = sphi 0, %s223
    %s238 = sphi 0, %s224
    %s242 = sphi 0, %s242
    %s244 = sphi 0, %s242
    %s245 = sphi 0, %s244
    %s259 = sphi 0, %s245
    %s263 = sphi 0, %s263
    %s265 = sphi 0, %s263
    %s266 = sphi 0, %s265
    %s280 = sphi 0, %s266
    %s284 = sphi 0, %s284
    %s286 = sphi 0, %s284
    %s287 = sphi 0, %s286
    %s301 = sphi 0, %s287
    %s307 = sphi 0, %s309
    %s310 = sphi 0, %s307
    %s311 = sphi 0, %s310
    %s327 = sphi 0, %s311
  $region4: #{flex_sf_forward.1} parent=0 // loop_header_branch
    %22 = sbr.rel (%p20) target = $region8
  $region5: #{flex_sf_forward.1} parent=0 // loop_body
    %s24 = ssub.s32 %s19, 1
    %s25 = ssub.s32 %s19, 2
    %s26 = sadd.s32 %s19, 1
    %s27 = ssub.s32 %s19, %s26
    %p28 = scmp.eq.s32.totalorder %s27, 0
    %s30 = sadd.s32 %s29, 1
    %s31 = scalar_select %p28, %s29, %s30
    %p34 = pneg %p28
    %p35 = scmp.eq.s32.totalorder %s19, 1
    %p36 = por %p34, %p35
    %p37 = scmp.ne.s32.totalorder %s29, %s32
    %p38 = scmp.eq.s32.totalorder %s19, 0
    %p39 = por %p37, %p38
    %p40 = scmp.ne.s32.totalorder %s29, %s32
    %p41 = scmp.eq.s32.totalorder %s24, 1
    %p42 = por %p40, %p41
    %p43 = scmp.ne.s32.totalorder %s32, %s33
    %p44 = scmp.eq.s32.totalorder %s24, 0
    %p45 = por %p43, %p44
    %p46 = scmp.ne.s32.totalorder %s32, %s33
    %p47 = scmp.eq.s32.totalorder %s25, 1
    %p48 = por %p46, %p47
    %p50 = scmp.ne.s32.totalorder %s33, %s49
    %p51 = scmp.eq.s32.totalorder %s25, 0
    %p52 = por %p50, %p51
    %s54 = sadd.s32 %s53, 1
    %p57 = scmp.eq.s32.totalorder %s19, 1
    %p58 = scmp.ne.s32.totalorder %s53, %s55
    %p59 = scmp.eq.s32.totalorder %s19, 0
    %p60 = por %p58, %p59
    %p61 = scmp.ne.s32.totalorder %s53, %s55
    %p62 = scmp.eq.s32.totalorder %s24, 1
    %p63 = por %p61, %p62
    %p64 = scmp.ne.s32.totalorder %s55, %s56
    %p65 = scmp.eq.s32.totalorder %s24, 0
    %p66 = por %p64, %p65
    %p67 = scmp.ne.s32.totalorder %s55, %s56
    %p68 = scmp.eq.s32.totalorder %s25, 1
    %p69 = por %p67, %p68
    %p71 = scmp.ne.s32.totalorder %s56, %s70
    %p72 = scmp.eq.s32.totalorder %s25, 0
    %p73 = por %p71, %p72
    %s75 = sadd.s32 %s74, 1
    %p78 = scmp.eq.s32.totalorder %s19, 1
    %p79 = scmp.ne.s32.totalorder %s74, %s76
    %p80 = scmp.eq.s32.totalorder %s19, 0
    %p81 = por %p79, %p80
    %p82 = scmp.ne.s32.totalorder %s74, %s76
    %p83 = scmp.eq.s32.totalorder %s24, 1
    %p84 = por %p82, %p83
    %p85 = scmp.ne.s32.totalorder %s76, %s77
    %p86 = scmp.eq.s32.totalorder %s24, 0
    %p87 = por %p85, %p86
    %p88 = scmp.ne.s32.totalorder %s76, %s77
    %p89 = scmp.eq.s32.totalorder %s25, 1
    %p90 = por %p88, %p89
    %p92 = scmp.ne.s32.totalorder %s77, %s91
    %p93 = scmp.eq.s32.totalorder %s25, 0
    %p94 = por %p92, %p93
    %s96 = sadd.s32 %s95, 1
    %p99 = scmp.eq.s32.totalorder %s19, 1
    %p100 = scmp.ne.s32.totalorder %s95, %s97
    %p101 = scmp.eq.s32.totalorder %s19, 0
    %p102 = por %p100, %p101
    %p103 = scmp.ne.s32.totalorder %s95, %s97
    %p104 = scmp.eq.s32.totalorder %s24, 1
    %p105 = por %p103, %p104
    %p106 = scmp.ne.s32.totalorder %s97, %s98
    %p107 = scmp.eq.s32.totalorder %s24, 0
    %p108 = por %p106, %p107
    %p109 = scmp.ne.s32.totalorder %s97, %s98
    %p110 = scmp.eq.s32.totalorder %s25, 1
    %p111 = por %p109, %p110
    %p113 = scmp.ne.s32.totalorder %s98, %s112
    %p114 = scmp.eq.s32.totalorder %s25, 0
    %p115 = por %p113, %p114
    %s117 = sadd.s32 %s116, 1
    %p120 = scmp.eq.s32.totalorder %s19, 1
    %p121 = scmp.ne.s32.totalorder %s116, %s118
    %p122 = scmp.eq.s32.totalorder %s19, 0
    %p123 = por %p121, %p122
    %p124 = scmp.ne.s32.totalorder %s116, %s118
    %p125 = scmp.eq.s32.totalorder %s24, 1
    %p126 = por %p124, %p125
    %p127 = scmp.ne.s32.totalorder %s118, %s119
    %p128 = scmp.eq.s32.totalorder %s24, 0
    %p129 = por %p127, %p128
    %p130 = scmp.ne.s32.totalorder %s118, %s119
    %p131 = scmp.eq.s32.totalorder %s25, 1
    %p132 = por %p130, %p131
    %p134 = scmp.ne.s32.totalorder %s119, %s133
    %p135 = scmp.eq.s32.totalorder %s25, 0
    %p136 = por %p134, %p135
    %s138 = sadd.s32 %s137, 1
    %p141 = scmp.eq.s32.totalorder %s19, 1
    %p142 = scmp.ne.s32.totalorder %s137, %s139
    %p143 = scmp.eq.s32.totalorder %s19, 0
    %p144 = por %p142, %p143
    %p145 = scmp.ne.s32.totalorder %s137, %s139
    %p146 = scmp.eq.s32.totalorder %s24, 1
    %p147 = por %p145, %p146
    %p148 = scmp.ne.s32.totalorder %s139, %s140
    %p149 = scmp.eq.s32.totalorder %s24, 0
    %p150 = por %p148, %p149
    %p151 = scmp.ne.s32.totalorder %s139, %s140
    %p152 = scmp.eq.s32.totalorder %s25, 1
    %p153 = por %p151, %p152
    %p155 = scmp.ne.s32.totalorder %s140, %s154
    %p156 = scmp.eq.s32.totalorder %s25, 0
    %p157 = por %p155, %p156
    %s159 = sadd.s32 %s158, 1
    %p162 = scmp.eq.s32.totalorder %s19, 1
    %p163 = scmp.ne.s32.totalorder %s158, %s160
    %p164 = scmp.eq.s32.totalorder %s19, 0
    %p165 = por %p163, %p164
    %p166 = scmp.ne.s32.totalorder %s158, %s160
    %p167 = scmp.eq.s32.totalorder %s24, 1
    %p168 = por %p166, %p167
    %p169 = scmp.ne.s32.totalorder %s160, %s161
    %p170 = scmp.eq.s32.totalorder %s24, 0
    %p171 = por %p169, %p170
    %p172 = scmp.ne.s32.totalorder %s160, %s161
    %p173 = scmp.eq.s32.totalorder %s25, 1
    %p174 = por %p172, %p173
    %p176 = scmp.ne.s32.totalorder %s161, %s175
    %p177 = scmp.eq.s32.totalorder %s25, 0
    %p178 = por %p176, %p177
    %s180 = sadd.s32 %s179, 1
    %p183 = scmp.eq.s32.totalorder %s19, 1
    %p184 = scmp.ne.s32.totalorder %s179, %s181
    %p185 = scmp.eq.s32.totalorder %s19, 0
    %p186 = por %p184, %p185
    %p187 = scmp.ne.s32.totalorder %s179, %s181
    %p188 = scmp.eq.s32.totalorder %s24, 1
    %p189 = por %p187, %p188
    %p190 = scmp.ne.s32.totalorder %s181, %s182
    %p191 = scmp.eq.s32.totalorder %s24, 0
    %p192 = por %p190, %p191
    %p193 = scmp.ne.s32.totalorder %s181, %s182
    %p194 = scmp.eq.s32.totalorder %s25, 1
    %p195 = por %p193, %p194
    %p197 = scmp.ne.s32.totalorder %s182, %s196
    %p198 = scmp.eq.s32.totalorder %s25, 0
    %p199 = por %p197, %p198
    %s201 = sadd.s32 %s200, 1
    %p204 = scmp.eq.s32.totalorder %s19, 1
    %p205 = scmp.ne.s32.totalorder %s200, %s202
    %p206 = scmp.eq.s32.totalorder %s19, 0
    %p207 = por %p205, %p206
    %p208 = scmp.ne.s32.totalorder %s200, %s202
    %p209 = scmp.eq.s32.totalorder %s24, 1
    %p210 = por %p208, %p209
    %p211 = scmp.ne.s32.totalorder %s202, %s203
    %p212 = scmp.eq.s32.totalorder %s24, 0
    %p213 = por %p211, %p212
    %p214 = scmp.ne.s32.totalorder %s202, %s203
    %p215 = scmp.eq.s32.totalorder %s25, 1
    %p216 = por %p214, %p215
    %p218 = scmp.ne.s32.totalorder %s203, %s217
    %p219 = scmp.eq.s32.totalorder %s25, 0
    %p220 = por %p218, %p219
    %s222 = sadd.s32 %s221, 1
    %p225 = scmp.eq.s32.totalorder %s19, 1
    %p226 = scmp.ne.s32.totalorder %s221, %s223
    %p227 = scmp.eq.s32.totalorder %s19, 0
    %p228 = por %p226, %p227
    %p229 = scmp.ne.s32.totalorder %s221, %s223
    %p230 = scmp.eq.s32.totalorder %s24, 1
    %p231 = por %p229, %p230
    %p232 = scmp.ne.s32.totalorder %s223, %s224
    %p233 = scmp.eq.s32.totalorder %s24, 0
    %p234 = por %p232, %p233
    %p235 = scmp.ne.s32.totalorder %s223, %s224
    %p236 = scmp.eq.s32.totalorder %s25, 1
    %p237 = por %p235, %p236
    %p239 = scmp.ne.s32.totalorder %s224, %s238
    %p240 = scmp.eq.s32.totalorder %s25, 0
    %p241 = por %p239, %p240
    %s243 = sadd.s32 %s242, 1
    %p246 = scmp.eq.s32.totalorder %s19, 1
    %p247 = scmp.ne.s32.totalorder %s242, %s244
    %p248 = scmp.eq.s32.totalorder %s19, 0
    %p249 = por %p247, %p248
    %p250 = scmp.ne.s32.totalorder %s242, %s244
    %p251 = scmp.eq.s32.totalorder %s24, 1
    %p252 = por %p250, %p251
    %p253 = scmp.ne.s32.totalorder %s244, %s245
    %p254 = scmp.eq.s32.totalorder %s24, 0
    %p255 = por %p253, %p254
    %p256 = scmp.ne.s32.totalorder %s244, %s245
    %p257 = scmp.eq.s32.totalorder %s25, 1
    %p258 = por %p256, %p257
    %p260 = scmp.ne.s32.totalorder %s245, %s259
    %p261 = scmp.eq.s32.totalorder %s25, 0
    %p262 = por %p260, %p261
    %s264 = sadd.s32 %s263, 1
    %p267 = scmp.eq.s32.totalorder %s19, 1
    %p268 = scmp.ne.s32.totalorder %s263, %s265
    %p269 = scmp.eq.s32.totalorder %s19, 0
    %p270 = por %p268, %p269
    %p271 = scmp.ne.s32.totalorder %s263, %s265
    %p272 = scmp.eq.s32.totalorder %s24, 1
    %p273 = por %p271, %p272
    %p274 = scmp.ne.s32.totalorder %s265, %s266
    %p275 = scmp.eq.s32.totalorder %s24, 0
    %p276 = por %p274, %p275
    %p277 = scmp.ne.s32.totalorder %s265, %s266
    %p278 = scmp.eq.s32.totalorder %s25, 1
    %p279 = por %p277, %p278
    %p281 = scmp.ne.s32.totalorder %s266, %s280
    %p282 = scmp.eq.s32.totalorder %s25, 0
    %p283 = por %p281, %p282
    %s285 = sadd.s32 %s284, 1
    %p288 = scmp.eq.s32.totalorder %s19, 1
    %p289 = scmp.ne.s32.totalorder %s284, %s286
    %p290 = scmp.eq.s32.totalorder %s19, 0
    %p291 = por %p289, %p290
    %p292 = scmp.ne.s32.totalorder %s284, %s286
    %p293 = scmp.eq.s32.totalorder %s24, 1
    %p294 = por %p292, %p293
    %p295 = scmp.ne.s32.totalorder %s286, %s287
    %p296 = scmp.eq.s32.totalorder %s24, 0
    %p297 = por %p295, %p296
    %p298 = scmp.ne.s32.totalorder %s286, %s287
    %p299 = scmp.eq.s32.totalorder %s25, 1
    %p300 = por %p298, %p299
    %p302 = scmp.ne.s32.totalorder %s287, %s301
    %p303 = scmp.eq.s32.totalorder %s25, 0
    %p304 = por %p302, %p303
    %s305 = ssub.s32 %s19, %s26
    %p306 = scmp.eq.s32.totalorder %s305, 0
    %s308 = sadd.s32 %s307, 1
    %s309 = scalar_select %p306, %s307, %s308
    %p312 = pneg %p306
    %p313 = scmp.eq.s32.totalorder %s19, 1
    %p314 = por %p312, %p313
    %p315 = scmp.ne.s32.totalorder %s307, %s310
    %p316 = scmp.eq.s32.totalorder %s19, 0
    %p317 = por %p315, %p316
    %p318 = scmp.ne.s32.totalorder %s307, %s310
    %p319 = scmp.eq.s32.totalorder %s24, 1
    %p320 = por %p318, %p319
    %p321 = scmp.ne.s32.totalorder %s310, %s311
    %p322 = scmp.eq.s32.totalorder %s24, 0
    %p323 = por %p321, %p322
    %p324 = scmp.ne.s32.totalorder %s310, %s311
    %p325 = scmp.eq.s32.totalorder %s25, 1
    %p326 = por %p324, %p325
    %p328 = scmp.ne.s32.totalorder %s311, %s327
    %p329 = scmp.eq.s32.totalorder %s25, 0
    %p330 = por %p328, %p329
    %p331 = scmp.le.s32.totalorder 1, %s19
    %p332 = scmp.lt.s32.totalorder %s19, 3
    %p333 = pnand %p331, %p332
    %p334 = pneg %p333
    // Predicated region
    $region9: #{flex_sf_forward.1} parent=5 // pred_check
      _
    $region10: #{flex_sf_forward.1} parent=5 // pred_check_branch
      %336 = sbr.rel (%p333) target = $region12
    $region11: #{flex_sf_forward.1} parent=5 // pred_region
      %s337 = ssub.s32 %s19, 1
      // Predicated region
      $region13: #{flex_sf_forward.1} parent=11 // pred_check
        %p338 = pneg %p66
      $region14: #{flex_sf_forward.1} parent=11 // pred_check_branch
        %340 = sbr.rel (%p338) target = $region16
      $region15: #{flex_sf_forward.1} parent=11 // pred_region
        _
      $region16: #{flex_sf_forward.1} parent=11 // pred_fallthru
        _
      // Predicated region
      $region17: #{flex_sf_forward.1} parent=11 // pred_check
        %p341 = pneg %p87
      $region18: #{flex_sf_forward.1} parent=11 // pred_check_branch
        %343 = sbr.rel (%p341) target = $region20
      $region19: #{flex_sf_forward.1} parent=11 // pred_region
        _
      $region20: #{flex_sf_forward.1} parent=11 // pred_fallthru
        _
      // Predicated region
      $region21: #{flex_sf_forward.1} parent=11 // pred_check
        %p344 = pneg %p108
      $region22: #{flex_sf_forward.1} parent=11 // pred_check_branch
        %346 = sbr.rel (%p344) target = $region24
      $region23: #{flex_sf_forward.1} parent=11 // pred_region
        _
      $region24: #{flex_sf_forward.1} parent=11 // pred_fallthru
        _
      // Predicated region
      $region25: #{flex_sf_forward.1} parent=11 // pred_check
        %p347 = pneg %p129
      $region26: #{flex_sf_forward.1} parent=11 // pred_check_branch
        %349 = sbr.rel (%p347) target = $region28
      $region27: #{flex_sf_forward.1} parent=11 // pred_region
        _
      $region28: #{flex_sf_forward.1} parent=11 // pred_fallthru
        _
      // Predicated region
      $region29: #{flex_sf_forward.1} parent=11 // pred_check
        %p350 = pneg %p150
      $region30: #{flex_sf_forward.1} parent=11 // pred_check_branch
        %352 = sbr.rel (%p350) target = $region32
      $region31: #{flex_sf_forward.1} parent=11 // pred_region
        _
      $region32: #{flex_sf_forward.1} parent=11 // pred_fallthru
        _
      // Predicated region
      $region33: #{flex_sf_forward.1} parent=11 // pred_check
        %p353 = pneg %p171
      $region34: #{flex_sf_forward.1} parent=11 // pred_check_branch
        %355 = sbr.rel (%p353) target = $region36
      $region35: #{flex_sf_forward.1} parent=11 // pred_region
        _
      $region36: #{flex_sf_forward.1} parent=11 // pred_fallthru
        _
      // Predicated region
      $region37: #{flex_sf_forward.1} parent=11 // pred_check
        %p356 = pneg %p192
      $region38: #{flex_sf_forward.1} parent=11 // pred_check_branch
        %358 = sbr.rel (%p356) target = $region40
      $region39: #{flex_sf_forward.1} parent=11 // pred_region
        _
      $region40: #{flex_sf_forward.1} parent=11 // pred_fallthru
        _
      // Predicated region
      $region41: #{flex_sf_forward.1} parent=11 // pred_check
        %p359 = pneg %p213
      $region42: #{flex_sf_forward.1} parent=11 // pred_check_branch
        %361 = sbr.rel (%p359) target = $region44
      $region43: #{flex_sf_forward.1} parent=11 // pred_region
        _
      $region44: #{flex_sf_forward.1} parent=11 // pred_fallthru
        _
      // Predicated region
      $region45: #{flex_sf_forward.1} parent=11 // pred_check
        %p362 = pneg %p234
      $region46: #{flex_sf_forward.1} parent=11 // pred_check_branch
        %364 = sbr.rel (%p362) target = $region48
      $region47: #{flex_sf_forward.1} parent=11 // pred_region
        _
      $region48: #{flex_sf_forward.1} parent=11 // pred_fallthru
        _
      // Predicated region
      $region49: #{flex_sf_forward.1} parent=11 // pred_check
        %p365 = pneg %p255
      $region50: #{flex_sf_forward.1} parent=11 // pred_check_branch
        %367 = sbr.rel (%p365) target = $region52
      $region51: #{flex_sf_forward.1} parent=11 // pred_region
        _
      $region52: #{flex_sf_forward.1} parent=11 // pred_fallthru
        _
      // Predicated region
      $region53: #{flex_sf_forward.1} parent=11 // pred_check
        %p368 = pneg %p276
      $region54: #{flex_sf_forward.1} parent=11 // pred_check_branch
        %370 = sbr.rel (%p368) target = $region56
      $region55: #{flex_sf_forward.1} parent=11 // pred_region
        _
      $region56: #{flex_sf_forward.1} parent=11 // pred_fallthru
        _
      // Predicated region
      $region57: #{flex_sf_forward.1} parent=11 // pred_check
        %p371 = pneg %p297
      $region58: #{flex_sf_forward.1} parent=11 // pred_check_branch
        %373 = sbr.rel (%p371) target = $region60
      $region59: #{flex_sf_forward.1} parent=11 // pred_region
        _
      $region60: #{flex_sf_forward.1} parent=11 // pred_fallthru
        _
    $region12: #{flex_sf_forward.1} parent=5 // pred_fallthru
      _
    %p374 = scmp.lt.s32.totalorder %s19, 2
    // Predicated region
    $region61: #{flex_sf_forward.1} parent=5 // pred_check
      %p375 = pneg %p374
    $region62: #{flex_sf_forward.1} parent=5 // pred_check_branch
      %377 = sbr.rel (%p375) target = $region64
    $region63: #{flex_sf_forward.1} parent=5 // pred_region
      // Predicated region
      $region65: #{flex_sf_forward.1} parent=63 // pred_check
        %p378 = pneg %p39
      $region66: #{flex_sf_forward.1} parent=63 // pred_check_branch
        %380 = sbr.rel (%p378) target = $region68
      $region67: #{flex_sf_forward.1} parent=63 // pred_region
        %p381 = scmp.lt.s32.totalorder %s19, 1
        %s382 = scalar_select %p381, %s19, 1
        %s383 = smul.addr %s382, 2
        %s384 = smul.addr %s383, 4
        %s385 = scalar_lea.vmem %s0, %s384
      $region68: #{flex_sf_forward.1} parent=63 // pred_fallthru
        _
    $region64: #{flex_sf_forward.1} parent=5 // pred_fallthru
      _
    %p386 = scmp.le.s32.totalorder 1, %s19
    %p387 = scmp.lt.s32.totalorder %s19, 3
    %p388 = pnand %p386, %p387
    %p389 = pneg %p388
    // Predicated region
    $region69: #{flex_sf_forward.1} parent=5 // pred_check
      _
    $region70: #{flex_sf_forward.1} parent=5 // pred_check_branch
      %391 = sbr.rel (%p388) target = $region72
    $region71: #{flex_sf_forward.1} parent=5 // pred_region
      %s392 = ssub.s32 %s19, 1
      %p393 = scmp.lt.s32.totalorder %s24, 1
      %s394 = scalar_select %p393, %s24, 1
      %s395 = smul.addr %s394, 2
      %s396 = smul.addr %s395, 4
      %s397 = scalar_lea.vmem %s0, %s396
      %p398 = pneg %p45
      %p399 = pneg %p42
      %p400 = pneg %p66
      %p401 = pneg %p63
      %p402 = pneg %p87
      %p403 = pneg %p84
      %p404 = pneg %p108
      %p405 = pneg %p105
      %p406 = pneg %p129
      %p407 = pneg %p126
      %p408 = pneg %p150
      %p409 = pneg %p147
      %p410 = pneg %p171
      %p411 = pneg %p168
      %p412 = pneg %p192
      %p413 = pneg %p189
      %p414 = pneg %p213
      %p415 = pneg %p210
      %p416 = pneg %p234
      %p417 = pneg %p231
      %p418 = pneg %p255
      %p419 = pneg %p252
      %p420 = pneg %p276
      %p421 = pneg %p273
      %p422 = pneg %p297
      %p423 = pneg %p294
      %p424 = pneg %p323
      %p425 = pneg %p320
      %p426 = scmp.lt.s32.totalorder %s24, 1
      %s427 = scalar_select %p426, %s24, 1
      %s428 = smul.addr %s427, 4
      %s429 = smul.addr %s428, 8
      %s430 = scalar_lea.vmem %s13, %s429
      %p431 = scmp.lt.s32.totalorder %s24, 1
      %s432 = scalar_select %p431, %s24, 1
      %s433 = smul.addr %s432, 2
      %s434 = smul.addr %s433, 4
      %s435 = scalar_lea.vmem %s0, %s434
      %p436 = scmp.lt.s32.totalorder %s24, 1
      %s437 = scalar_select %p436, %s24, 1
      %s438 = smul.addr %s437, 4
      %s439 = smul.addr %s438, 8
      %s440 = scalar_lea.vmem %s13, %s439
      %v441 = vld [vmem:[%s1] sm:$0xff]
      %v442 = vld [vmem:[%s1 + $0x8] sm:$0xff]
      %v443 = vld [vmem:[%s1 + $0x10] sm:$0x1]
      %v444 = vld [vmem:[%s1 + $0x18] sm:$0x1]
      %v445 = vld [vmem:[%s435] sm:$0xff]
      %v447 = vcombine.high %v445, %v445
      %449 = vrot.lane.b32.xlu0 %v445, 17
      %v450 = vpop.permute.xlu0 %449
      %451 = vrot.lane.b32.xlu0 %v447, 17
      %v452 = vpop.permute.xlu0 %451
      %v453 = vlaneseq
      %v454 = vand.u32 %v453, 127
      %vm455 = vcmp.lt.s32.totalorder %v454, 17
      %v456 = vsel %vm455, %v450, %v452
      %v457 = vsel %vm455, %v452, %v450
      %v458 = vlaneseq
      %v459 = vshrl.u32 %v458, 7
      %v460 = vsub.s32 0, %v459
      %v461 = vrot.slane %v441, %v460
      %v462 = vlaneseq
      %v463 = vshrl.u32 %v462, 7
      %v464 = vsub.s32 0, %v463
      %v465 = vrot.slane %v442, %v464
      %v466 = vmul.f32 %v457, %v461
      %v467 = vmul.f32 %v456, %v465
      %468 = vst [vmem:[#allocation2] sm:$0xf] %v466
      %469 = vst [vmem:[#allocation2 + $0x8] sm:$0xf] %v467
      %470 = vrot.lane.b32.xlu0 %v445, 16
      %v471 = vpop.permute.xlu0 %470
      %472 = vrot.lane.b32.xlu0 %v447, 16
      %v473 = vpop.permute.xlu0 %472
      %vm474 = vcmp.lt.s32.totalorder %v454, 16
      %v475 = vsel %vm474, %v471, %v473
      %v476 = vsel %vm474, %v473, %v471
      %v477 = vlaneseq
      %v478 = vshrl.u32 %v477, 7
      %v479 = vsub.s32 1, %v478
      %v480 = vrot.slane %v441, %v479
      %v481 = vlaneseq
      %v482 = vshrl.u32 %v481, 7
      %v483 = vsub.s32 1, %v482
      %v484 = vrot.slane %v442, %v483
      %v485 = vmul.f32 %v476, %v480
      %v486 = vmul.f32 %v475, %v484
      %v489 = vrot.slane %v485, 4
      %v490 = vrot.slane %v486, 4
      %493 = vst [vmem:[#allocation2] sm:$0xf0] %v489
      %494 = vst [vmem:[#allocation2 + $0x8] sm:$0xf0] %v490
      %495 = vrot.lane.b32.xlu0 %v445, 15
      %v496 = vpop.permute.xlu0 %495
      %497 = vrot.lane.b32.xlu0 %v447, 15
      %v498 = vpop.permute.xlu0 %497
      %vm499 = vcmp.lt.s32.totalorder %v454, 15
      %v500 = vsel %vm499, %v496, %v498
      %v501 = vsel %vm499, %v498, %v496
      %v502 = vlaneseq
      %v503 = vshrl.u32 %v502, 7
      %v504 = vsub.s32 2, %v503
      %v505 = vrot.slane %v441, %v504
      %v506 = vlaneseq
      %v507 = vshrl.u32 %v506, 7
      %v508 = vsub.s32 2, %v507
      %v509 = vrot.slane %v442, %v508
      %v510 = vmul.f32 %v501, %v505
      %v511 = vmul.f32 %v500, %v509
      %512 = vst [vmem:[#allocation2 + $0x10] sm:$0xf] %v510
      %513 = vst [vmem:[#allocation2 + $0x18] sm:$0xf] %v511
      %514 = vrot.lane.b32.xlu0 %v445, 1
      %v515 = vpop.permute.xlu0 %514
      %516 = vrot.lane.b32.xlu0 %v447, 1
      %v517 = vpop.permute.xlu0 %516
      %vm518 = vcmp.lt.s32.totalorder %v454, 1
      %v519 = vsel %vm518, %v515, %v517
      %v520 = vsel %vm518, %v517, %v515
      %v521 = vlaneseq
      %v522 = vshrl.u32 %v521, 7
      %v523 = vsub.s32 3, %v522
      %v524 = vrot.slane %v441, %v523
      %v525 = vlaneseq
      %v526 = vshrl.u32 %v525, 7
      %v527 = vsub.s32 3, %v526
      %v528 = vrot.slane %v442, %v527
      %v529 = vmul.f32 %v520, %v524
      %v530 = vmul.f32 %v519, %v528
      %v533 = vrot.slane %v529, 4
      %v534 = vrot.slane %v530, 4
      %537 = vst [vmem:[#allocation2 + $0x10] sm:$0xf0] %v533
      %538 = vst [vmem:[#allocation2 + $0x18] sm:$0xf0] %v534
      %v539 = vlaneseq
      %v540 = vshrl.u32 %v539, 7
      %v541 = vsub.s32 4, %v540
      %v542 = vrot.slane %v441, %v541
      %v543 = vlaneseq
      %v544 = vshrl.u32 %v543, 7
      %v545 = vsub.s32 4, %v544
      %v546 = vrot.slane %v442, %v545
      %v549 = vcombine.low %v542, %v546
      %v551 = vmul.f32 %v445, %v549
      %v553 = vcombine.high %v551, %v551
      %555 = vst [vmem:[#allocation2 + $0x20] sm:$0xf] %v551
      %556 = vst [vmem:[#allocation2 + $0x28] sm:$0xf] %v553
      %557 = vrot.lane.b32.xlu0 %v445, 127
      %v558 = vpop.permute.xlu0 %557
      %559 = vrot.lane.b32.xlu0 %v447, 127
      %v560 = vpop.permute.xlu0 %559
      %vm561 = vcmp.lt.s32.totalorder %v454, 127
      %v562 = vsel %vm561, %v558, %v560
      %v563 = vsel %vm561, %v560, %v558
      %v564 = vlaneseq
      %v565 = vshrl.u32 %v564, 7
      %v566 = vsub.s32 5, %v565
      %v567 = vrot.slane %v441, %v566
      %v568 = vlaneseq
      %v569 = vshrl.u32 %v568, 7
      %v570 = vsub.s32 5, %v569
      %v571 = vrot.slane %v442, %v570
      %v572 = vmul.f32 %v562, %v567
      %v573 = vmul.f32 %v563, %v571
      %v576 = vrot.slane %v572, 4
      %v577 = vrot.slane %v573, 4
      %580 = vst [vmem:[#allocation2 + $0x20] sm:$0xf0] %v576
      %581 = vst [vmem:[#allocation2 + $0x28] sm:$0xf0] %v577
      %582 = vrot.lane.b32.xlu0 %v445, 113
      %v583 = vpop.permute.xlu0 %582
      %584 = vrot.lane.b32.xlu0 %v447, 113
      %v585 = vpop.permute.xlu0 %584
      %vm586 = vcmp.lt.s32.totalorder %v454, 113
      %v587 = vsel %vm586, %v583, %v585
      %v588 = vsel %vm586, %v585, %v583
      %v589 = vlaneseq
      %v590 = vshrl.u32 %v589, 7
      %v591 = vsub.s32 6, %v590
      %v592 = vrot.slane %v441, %v591
      %v593 = vlaneseq
      %v594 = vshrl.u32 %v593, 7
      %v595 = vsub.s32 6, %v594
      %v596 = vrot.slane %v442, %v595
      %v597 = vmul.f32 %v587, %v592
      %v598 = vmul.f32 %v588, %v596
      %599 = vst [vmem:[#allocation2 + $0x30] sm:$0xf] %v597
      %600 = vst [vmem:[#allocation2 + $0x38] sm:$0xf] %v598
      %601 = vrot.lane.b32.xlu0 %v445, 112
      %v602 = vpop.permute.xlu0 %601
      %603 = vrot.lane.b32.xlu0 %v447, 112
      %v604 = vpop.permute.xlu0 %603
      %vm605 = vcmp.lt.s32.totalorder %v454, 112
      %v606 = vsel %vm605, %v602, %v604
      %v607 = vsel %vm605, %v604, %v602
      %v608 = vlaneseq
      %v609 = vshrl.u32 %v608, 7
      %v610 = vsub.s32 7, %v609
      %v611 = vrot.slane %v441, %v610
      %v612 = vlaneseq
      %v613 = vshrl.u32 %v612, 7
      %v614 = vsub.s32 7, %v613
      %v615 = vrot.slane %v442, %v614
      %v616 = vmul.f32 %v606, %v611
      %v617 = vmul.f32 %v607, %v615
      %v620 = vrot.slane %v616, 4
      %v621 = vrot.slane %v617, 4
      %624 = vst [vmem:[#allocation2 + $0x30] sm:$0xf0] %v620
      %625 = vst [vmem:[#allocation2 + $0x38] sm:$0xf0] %v621
      %626 = vrot.lane.b32.xlu0 %v445, 111
      %v627 = vpop.permute.xlu0 %626
      %628 = vrot.lane.b32.xlu0 %v447, 111
      %v629 = vpop.permute.xlu0 %628
      %vm630 = vcmp.lt.s32.totalorder %v454, 111
      %v631 = vsel %vm630, %v627, %v629
      %v632 = vsel %vm630, %v629, %v627
      %v633 = vlaneseq
      %v634 = vshrl.u32 %v633, 7
      %v635 = vsub.s32 0, %v634
      %v636 = vrot.slane %v443, %v635
      %v637 = vlaneseq
      %v638 = vshrl.u32 %v637, 7
      %v639 = vsub.s32 0, %v638
      %v640 = vrot.slane %v444, %v639
      %v641 = vmul.f32 %v631, %v636
      %v642 = vmul.f32 %v632, %v640
      %643 = vst [vmem:[#allocation2 + $0x40] sm:$0xf] %v641
      %644 = vst [vmem:[#allocation2 + $0x48] sm:$0xf] %v642
      %v645 = vld [vmem:[#allocation2] sm:$0xff]
      %v646 = vld [vmem:[#allocation2 + $0x8] sm:$0xff]
      %v647 = vld [vmem:[#allocation2 + $0x10] sm:$0xff]
      %v648 = vld [vmem:[#allocation2 + $0x18] sm:$0xff]
      %v649 = vld [vmem:[#allocation2 + $0x20] sm:$0xff]
      %v650 = vld [vmem:[#allocation2 + $0x28] sm:$0xff]
      %v651 = vld [vmem:[#allocation2 + $0x30] sm:$0xff]
      %v652 = vld [vmem:[#allocation2 + $0x38] sm:$0xff]
      %v653 = vld [vmem:[#allocation2 + $0x40] sm:$0xf]
      %v654 = vld [vmem:[#allocation2 + $0x48] sm:$0xf]
      %v655 = vld [vmem:[%s3] sm:$0xf]
      %v656 = vld [vmem:[%s4] sm:$0xf]
      %658 = vset.pattern.permute.xlu0 0
      %659 = vperm.xlu0 %658, %v656
      %v660 = vpop.permute.xlu0 %659
      %vm662 = vcmask 293888
      %v664 = vsel %vm662, %v655, 0
      %vm666 = vcmask 1043456
      %v668 = vsel %vm666, %v653, 0
      %v671 = vsel %vm666, %v654, 0
      %673 = vmatprep.subr.mxu0 %v646
      %674 = vmatpush1.msra.mxu0 %v645
      %675 = vmatprep.subr.mxu0 %v648
      %676 = vmatpush1.msra.mxu0 %v647
      %677 = vmatprep.subr.mxu0 %v650
      %678 = vmatpush1.msra.mxu0 %v649
      %679 = vmatprep.subr.mxu0 %v652
      %680 = vmatpush1.msra.mxu0 %v651
      %681 = vmatprep.subr.mxu0 %v671
      %682 = vmatpush1.msra.mxu0 %v668
      %683 = vmatprep.subr.mxu0 0.0
      %684 = vmatpush1.msra.mxu0 0.0
      %685 = vmatprep.subr.mxu0 0.0
      %686 = vmatpush1.msra.mxu0 0.0
      %687 = vmatprep.subr.mxu0 0.0
      %688 = vmatpush1.msra.mxu0 0.0
      %689 = vmatprep.subr.mxu0 0.0
      %690 = vmatpush1.msra.mxu0 0.0
      %691 = vmatprep.subr.mxu0 0.0
      %692 = vmatpush1.msra.mxu0 0.0
      %693 = vmatprep.subr.mxu0 0.0
      %694 = vmatpush1.msra.mxu0 0.0
      %695 = vmatprep.subr.mxu0 0.0
      %696 = vmatpush1.msra.mxu0 0.0
      %697 = vmatprep.subr.mxu0 0.0
      %698 = vmatpush1.msra.mxu0 0.0
      %699 = vmatprep.subr.mxu0 0.0
      %700 = vmatpush1.msra.mxu0 0.0
      %701 = vmatprep.subr.mxu0 0.0
      %702 = vmatpush1.msra.mxu0 0.0
      %703 = vmatprep.subr.mxu0 0.0
      %704 = vmatpush1.msra.mxu0 0.0
      %705 = vmatprep.subr.mxu0 0.0
      %706 = vmatpush1.msra.mxu0 0.0
      %707 = vmatprep.subr.mxu0 0.0
      %708 = vmatpush1.msra.mxu0 0.0
      %709 = vmatprep.subr.mxu0 0.0
      %710 = vmatpush1.msra.mxu0 0.0
      %711 = vmatprep.subr.mxu0 0.0
      %712 = vmatpush1.msra.mxu0 0.0
      %713 = vmatprep.subr.mxu0 0.0
      %714 = vmatpush1.msra.mxu0 0.0
      %715 = vmatprep.subr.mxu0 0.0
      %716 = vmatpush1.msra.mxu0 0.0
      %717 = vmatprep.subr.mxu0 0.0
      %718 = vmatpush1.msra.mxu0 0.0
      %719 = vmatprep.subr.mxu0 0.0
      %720 = vmatpush1.msra.mxu0 0.0
      %721 = vmatprep.subr.mxu0 0.0
      %722 = vmatpush1.msra.mxu0 0.0
      %723 = vmatprep.subr.mxu0 0.0
      %724 = vmatpush1.msra.mxu0 0.0
      %725 = vmatprep.subr.mxu0 0.0
      %726 = vmatpush1.msra.mxu0 0.0
      %727 = vmatprep.subr.mxu0 0.0
      %728 = vmatpush1.msra.mxu0 0.0
      %729 = vmatprep.subr.mxu0 0.0
      %730 = vmatpush1.msra.mxu0 0.0
      %731 = vmatprep.subr.mxu0 0.0
      %732 = vmatpush1.msra.mxu0 0.0
      %733 = vmatprep.subr.mxu0 0.0
      %734 = vmatpush1.msra.mxu0 0.0
      %735 = vmatprep.subr.mxu0 0.0
      %736 = vmatpush1.msra.mxu0 0.0
      %737 = vmatprep.mubr.f32.mxu0 0.0
      %738 = vmatmul.mubr.f32.gmra.mrb[0].mxu0 %v664
      %v739 = vpop.f32.mrb[0].mxu0
      %v740 = vadd.f32 %v660, %v739
      %v741 = vpop.f32.mrb[0].mxu0
      %v742 = vadd.f32 %v660, %v741
      %743 = vdwg.mxu0
      %v744 = vld [vmem:[%s7] sm:$0xff]
      %v745 = vld [vmem:[%s8] sm:$0xff]
      %747 = vset.pattern.permute.xlu0 0
      %748 = vperm.xlu0 %747, %v745
      %v749 = vpop.permute.xlu0 %748
      %v752 = vsel %vm662, %v744, 0
      %754 = vmatprep.subr.mxu0 %v646
      %755 = vmatpush1.msra.mxu0 %v645
      %756 = vmatprep.subr.mxu0 %v648
      %757 = vmatpush1.msra.mxu0 %v647
      %758 = vmatprep.subr.mxu0 %v650
      %759 = vmatpush1.msra.mxu0 %v649
      %760 = vmatprep.subr.mxu0 %v652
      %761 = vmatpush1.msra.mxu0 %v651
      %762 = vmatprep.subr.mxu0 %v671
      %763 = vmatpush1.msra.mxu0 %v668
      %764 = vmatprep.subr.mxu0 0.0
      %765 = vmatpush1.msra.mxu0 0.0
      %766 = vmatprep.subr.mxu0 0.0
      %767 = vmatpush1.msra.mxu0 0.0
      %768 = vmatprep.subr.mxu0 0.0
      %769 = vmatpush1.msra.mxu0 0.0
      %770 = vmatprep.subr.mxu0 0.0
      %771 = vmatpush1.msra.mxu0 0.0
      %772 = vmatprep.subr.mxu0 0.0
      %773 = vmatpush1.msra.mxu0 0.0
      %774 = vmatprep.subr.mxu0 0.0
      %775 = vmatpush1.msra.mxu0 0.0
      %776 = vmatprep.subr.mxu0 0.0
      %777 = vmatpush1.msra.mxu0 0.0
      %778 = vmatprep.subr.mxu0 0.0
      %779 = vmatpush1.msra.mxu0 0.0
      %780 = vmatprep.subr.mxu0 0.0
      %781 = vmatpush1.msra.mxu0 0.0
      %782 = vmatprep.subr.mxu0 0.0
      %783 = vmatpush1.msra.mxu0 0.0
      %784 = vmatprep.subr.mxu0 0.0
      %785 = vmatpush1.msra.mxu0 0.0
      %786 = vmatprep.subr.mxu0 0.0
      %787 = vmatpush1.msra.mxu0 0.0
      %788 = vmatprep.subr.mxu0 0.0
      %789 = vmatpush1.msra.mxu0 0.0
      %790 = vmatprep.subr.mxu0 0.0
      %791 = vmatpush1.msra.mxu0 0.0
      %792 = vmatprep.subr.mxu0 0.0
      %793 = vmatpush1.msra.mxu0 0.0
      %794 = vmatprep.subr.mxu0 0.0
      %795 = vmatpush1.msra.mxu0 0.0
      %796 = vmatprep.subr.mxu0 0.0
      %797 = vmatpush1.msra.mxu0 0.0
      %798 = vmatprep.subr.mxu0 0.0
      %799 = vmatpush1.msra.mxu0 0.0
      %800 = vmatprep.subr.mxu0 0.0
      %801 = vmatpush1.msra.mxu0 0.0
      %802 = vmatprep.subr.mxu0 0.0
      %803 = vmatpush1.msra.mxu0 0.0
      %804 = vmatprep.subr.mxu0 0.0
      %805 = vmatpush1.msra.mxu0 0.0
      %806 = vmatprep.subr.mxu0 0.0
      %807 = vmatpush1.msra.mxu0 0.0
      %808 = vmatprep.subr.mxu0 0.0
      %809 = vmatpush1.msra.mxu0 0.0
      %810 = vmatprep.subr.mxu0 0.0
      %811 = vmatpush1.msra.mxu0 0.0
      %812 = vmatprep.subr.mxu0 0.0
      %813 = vmatpush1.msra.mxu0 0.0
      %814 = vmatprep.subr.mxu0 0.0
      %815 = vmatpush1.msra.mxu0 0.0
      %816 = vmatprep.subr.mxu0 0.0
      %817 = vmatpush1.msra.mxu0 0.0
      %818 = vmatprep.mubr.f32.mxu0 0.0
      %819 = vmatmul.mubr.f32.gmra.mrb[0].mxu0 %v752
      %v820 = vpop.f32.mrb[0].mxu0
      %v821 = vadd.f32 %v749, %v820
      %v822 = vpop.f32.mrb[0].mxu0
      %v823 = vadd.f32 %v749, %v822
      %824 = vdwg.mxu0
      %v825 = vmax.f32 %v821, 0.0
      %v826 = vmax.f32 %v823, 0.0
      %v827 = vld [vmem:[%s2] sm:$0xff]
      %v828 = vld [vmem:[%s2 + $0x8] sm:$0xff]
      %v829 = vld [vmem:[%s2 + $0x10] sm:$0xff]
      %v830 = vld [vmem:[%s2 + $0x18] sm:$0xff]
      %v831 = vld [vmem:[%s2 + $0x20] sm:$0xff]
      %v832 = vld [vmem:[%s2 + $0x28] sm:$0xff]
      %v833 = vld [vmem:[%s2 + $0x30] sm:$0xff]
      %v834 = vld [vmem:[%s2 + $0x38] sm:$0xff]
      %v835 = vld [vmem:[%s2 + $0x40] sm:$0xff]
      %v836 = vld [vmem:[%s2 + $0x48] sm:$0xff]
      %v837 = vld [vmem:[%s2 + $0x50] sm:$0xff]
      %v838 = vld [vmem:[%s2 + $0x58] sm:$0xff]
      %v839 = vld [vmem:[%s2 + $0x60] sm:$0xff]
      %v840 = vld [vmem:[%s2 + $0x68] sm:$0xff]
      %v841 = vld [vmem:[%s2 + $0x70] sm:$0xff]
      %v842 = vld [vmem:[%s2 + $0x78] sm:$0xff]
      %v843 = vld [vmem:[%s2 + $0x80] sm:$0xff]
      %v844 = vld [vmem:[%s2 + $0x88] sm:$0xff]
      %v845 = vld [vmem:[%s2 + $0x90] sm:$0xff]
      %v846 = vld [vmem:[%s2 + $0x98] sm:$0xff]
      %v847 = vld [vmem:[%s2 + $0xa0] sm:$0xff]
      %v848 = vld [vmem:[%s2 + $0xa8] sm:$0xff]
      %v849 = vld [vmem:[%s2 + $0xb0] sm:$0xff]
      %v850 = vld [vmem:[%s2 + $0xb8] sm:$0xff]
      %v851 = vld [vmem:[%s2 + $0xc0] sm:$0xff]
      %v852 = vld [vmem:[%s2 + $0xc8] sm:$0xff]
      %v853 = vld [vmem:[%s2 + $0xd0] sm:$0xff]
      %v854 = vld [vmem:[%s2 + $0xd8] sm:$0xff]
      %v855 = vld [vmem:[%s2 + $0xe0] sm:$0xff]
      %v856 = vld [vmem:[%s2 + $0xe8] sm:$0xff]
      %v857 = vld [vmem:[%s2 + $0xf0] sm:$0xff]
      %v858 = vld [vmem:[%s2 + $0xf8] sm:$0xff]
      %v859 = vld [vmem:[%s2 + $0x100] sm:$0xff]
      %v860 = vld [vmem:[%s2 + $0x108] sm:$0xff]
      %v861 = vld [vmem:[%s2 + $0x110] sm:$0xff]
      %v862 = vld [vmem:[%s2 + $0x118] sm:$0xff]
      %v863 = vld [vmem:[%s2 + $0x120] sm:$0xff]
      %v864 = vld [vmem:[%s2 + $0x128] sm:$0xff]
      %v865 = vld [vmem:[%s2 + $0x130] sm:$0xff]
      %v866 = vld [vmem:[%s2 + $0x138] sm:$0xff]
      %v867 = vld [vmem:[%s2 + $0x140] sm:$0xff]
      %v868 = vld [vmem:[%s2 + $0x148] sm:$0xff]
      %v869 = vld [vmem:[%s2 + $0x150] sm:$0xff]
      %v870 = vld [vmem:[%s2 + $0x158] sm:$0xff]
      %v871 = vld [vmem:[%s2 + $0x160] sm:$0xff]
      %v872 = vld [vmem:[%s2 + $0x168] sm:$0xff]
      %v873 = vld [vmem:[%s2 + $0x170] sm:$0xff]
      %v874 = vld [vmem:[%s2 + $0x178] sm:$0xff]
      %v875 = vld [vmem:[%s2 + $0x180] sm:$0xff]
      %v876 = vld [vmem:[%s2 + $0x188] sm:$0xff]
      %v877 = vld [vmem:[%s2 + $0x190] sm:$0xff]
      %v878 = vld [vmem:[%s2 + $0x198] sm:$0xff]
      %v879 = vld [vmem:[%s2 + $0x1a0] sm:$0xff]
      %v880 = vld [vmem:[%s2 + $0x1a8] sm:$0xff]
      %v881 = vld [vmem:[%s2 + $0x1b0] sm:$0xff]
      %v882 = vld [vmem:[%s2 + $0x1b8] sm:$0xff]
      %v883 = vld [vmem:[%s2 + $0x1c0] sm:$0xff]
      %v884 = vld [vmem:[%s2 + $0x1c8] sm:$0xff]
      %v885 = vld [vmem:[%s2 + $0x1d0] sm:$0xff]
      %v886 = vld [vmem:[%s2 + $0x1d8] sm:$0xff]
      %v887 = vld [vmem:[%s2 + $0x1e0] sm:$0xff]
      %v888 = vld [vmem:[%s2 + $0x1e8] sm:$0xff]
      %v889 = vld [vmem:[%s2 + $0x1f0] sm:$0xff]
      %v890 = vld [vmem:[%s2 + $0x1f8] sm:$0xff]
      %v891 = vld [vmem:[%s2 + $0x200] sm:$0xff]
      %v892 = vld [vmem:[%s2 + $0x208] sm:$0xff]
      %v893 = vld [vmem:[%s2 + $0x210] sm:$0xff]
      %v894 = vld [vmem:[%s2 + $0x218] sm:$0xff]
      %v895 = vld [vmem:[%s2 + $0x220] sm:$0xff]
      %v896 = vld [vmem:[%s2 + $0x228] sm:$0xff]
      %v897 = vld [vmem:[%s2 + $0x230] sm:$0xff]
      %v898 = vld [vmem:[%s2 + $0x238] sm:$0xff]
      %v899 = vld [vmem:[%s2 + $0x240] sm:$0xff]
      %v900 = vld [vmem:[%s2 + $0x248] sm:$0xff]
      %v901 = vld [vmem:[%s2 + $0x250] sm:$0xff]
      %v902 = vld [vmem:[%s2 + $0x258] sm:$0xff]
      %v903 = vld [vmem:[%s2 + $0x260] sm:$0xff]
      %v904 = vld [vmem:[%s2 + $0x268] sm:$0xff]
      %v905 = vld [vmem:[%s2 + $0x270] sm:$0xff]
      %v906 = vld [vmem:[%s2 + $0x278] sm:$0xff]
      %v907 = vld [vmem:[%s2 + $0x280] sm:$0xff]
      %v908 = vld [vmem:[%s2 + $0x288] sm:$0xff]
      %v909 = vld [vmem:[%s2 + $0x290] sm:$0xff]
      %v910 = vld [vmem:[%s2 + $0x298] sm:$0xff]
      %v911 = vld [vmem:[%s2 + $0x2a0] sm:$0xff]
      %v912 = vld [vmem:[%s2 + $0x2a8] sm:$0xff]
      %v913 = vld [vmem:[%s2 + $0x2b0] sm:$0xff]
      %v914 = vld [vmem:[%s2 + $0x2b8] sm:$0xff]
      %v915 = vld [vmem:[%s2 + $0x2c0] sm:$0xff]
      %v916 = vld [vmem:[%s2 + $0x2c8] sm:$0xff]
      %v917 = vld [vmem:[%s2 + $0x2d0] sm:$0xff]
      %v918 = vld [vmem:[%s2 + $0x2d8] sm:$0xff]
      %v919 = vld [vmem:[%s2 + $0x2e0] sm:$0xff]
      %v920 = vld [vmem:[%s2 + $0x2e8] sm:$0xff]
      %v921 = vld [vmem:[%s2 + $0x2f0] sm:$0xff]
      %v922 = vld [vmem:[%s2 + $0x2f8] sm:$0xff]
      %v923 = vld [vmem:[%s2 + $0x300] sm:$0xff]
      %v924 = vld [vmem:[%s2 + $0x308] sm:$0xff]
      %v925 = vld [vmem:[%s2 + $0x310] sm:$0xff]
      %v926 = vld [vmem:[%s2 + $0x318] sm:$0xff]
      %v927 = vld [vmem:[%s2 + $0x320] sm:$0xff]
      %v928 = vld [vmem:[%s2 + $0x328] sm:$0xff]
      %v929 = vld [vmem:[%s2 + $0x330] sm:$0xff]
      %v930 = vld [vmem:[%s2 + $0x338] sm:$0xff]
      %v931 = vld [vmem:[%s2 + $0x340] sm:$0xff]
      %v932 = vld [vmem:[%s2 + $0x348] sm:$0xff]
      %v933 = vld [vmem:[%s2 + $0x350] sm:$0xff]
      %v934 = vld [vmem:[%s2 + $0x358] sm:$0xff]
      %v935 = vld [vmem:[%s2 + $0x360] sm:$0xff]
      %v936 = vld [vmem:[%s2 + $0x368] sm:$0xff]
      %v937 = vld [vmem:[%s2 + $0x370] sm:$0xff]
      %v938 = vld [vmem:[%s2 + $0x378] sm:$0xff]
      %v939 = vld [vmem:[%s2 + $0x380] sm:$0xff]
      %v940 = vld [vmem:[%s2 + $0x388] sm:$0xff]
      %v941 = vld [vmem:[%s2 + $0x390] sm:$0xff]
      %v942 = vld [vmem:[%s2 + $0x398] sm:$0xff]
      %v943 = vld [vmem:[%s2 + $0x3a0] sm:$0xff]
      %v944 = vld [vmem:[%s2 + $0x3a8] sm:$0xff]
      %v945 = vld [vmem:[%s2 + $0x3b0] sm:$0xff]
      %v946 = vld [vmem:[%s2 + $0x3b8] sm:$0xff]
      %v947 = vld [vmem:[%s2 + $0x3c0] sm:$0xff]
      %v948 = vld [vmem:[%s2 + $0x3c8] sm:$0xff]
      %v949 = vld [vmem:[%s2 + $0x3d0] sm:$0xff]
      %v950 = vld [vmem:[%s2 + $0x3d8] sm:$0xff]
      %v951 = vld [vmem:[%s2 + $0x3e0] sm:$0xff]
      %v952 = vld [vmem:[%s2 + $0x3e8] sm:$0xff]
      %v953 = vld [vmem:[%s2 + $0x3f0] sm:$0xff]
      %v954 = vld [vmem:[%s2 + $0x3f8] sm:$0xff]
      %955 = vmatprep.subr.mxu0 %v828
      %956 = vmatpush1.msra.mxu0 %v827
      %957 = vmatprep.subr.mxu0 %v832
      %958 = vmatpush1.msra.mxu0 %v831
      %959 = vmatprep.subr.mxu0 %v836
      %960 = vmatpush1.msra.mxu0 %v835
      %961 = vmatprep.subr.mxu0 %v840
      %962 = vmatpush1.msra.mxu0 %v839
      %963 = vmatprep.subr.mxu0 %v844
      %964 = vmatpush1.msra.mxu0 %v843
      %965 = vmatprep.subr.mxu0 %v848
      %966 = vmatpush1.msra.mxu0 %v847
      %967 = vmatprep.subr.mxu0 %v852
      %968 = vmatpush1.msra.mxu0 %v851
      %969 = vmatprep.subr.mxu0 %v856
      %970 = vmatpush1.msra.mxu0 %v855
      %971 = vmatprep.subr.mxu0 %v860
      %972 = vmatpush1.msra.mxu0 %v859
      %973 = vmatprep.subr.mxu0 %v864
      %974 = vmatpush1.msra.mxu0 %v863
      %975 = vmatprep.subr.mxu0 %v868
      %976 = vmatpush1.msra.mxu0 %v867
      %977 = vmatprep.subr.mxu0 %v872
      %978 = vmatpush1.msra.mxu0 %v871
      %979 = vmatprep.subr.mxu0 %v876
      %980 = vmatpush1.msra.mxu0 %v875
      %981 = vmatprep.subr.mxu0 %v880
      %982 = vmatpush1.msra.mxu0 %v879
      %983 = vmatprep.subr.mxu0 %v884
      %984 = vmatpush1.msra.mxu0 %v883
      %985 = vmatprep.subr.mxu0 %v888
      %986 = vmatpush1.msra.mxu0 %v887
      %987 = vmatprep.subr.mxu0 %v892
      %988 = vmatpush1.msra.mxu0 %v891
      %989 = vmatprep.subr.mxu0 %v896
      %990 = vmatpush1.msra.mxu0 %v895
      %991 = vmatprep.subr.mxu0 %v900
      %992 = vmatpush1.msra.mxu0 %v899
      %993 = vmatprep.subr.mxu0 %v904
      %994 = vmatpush1.msra.mxu0 %v903
      %995 = vmatprep.subr.mxu0 %v908
      %996 = vmatpush1.msra.mxu0 %v907
      %997 = vmatprep.subr.mxu0 %v912
      %998 = vmatpush1.msra.mxu0 %v911
      %999 = vmatprep.subr.mxu0 %v916
      %1000 = vmatpush1.msra.mxu0 %v915
      %1001 = vmatprep.subr.mxu0 %v920
      %1002 = vmatpush1.msra.mxu0 %v919
      %1003 = vmatprep.subr.mxu0 %v924
      %1004 = vmatpush1.msra.mxu0 %v923
      %1005 = vmatprep.subr.mxu0 %v928
      %1006 = vmatpush1.msra.mxu0 %v927
      %1007 = vmatprep.subr.mxu0 %v932
      %1008 = vmatpush1.msra.mxu0 %v931
      %1009 = vmatprep.subr.mxu0 %v936
      %1010 = vmatpush1.msra.mxu0 %v935
      %1011 = vmatprep.subr.mxu0 %v940
      %1012 = vmatpush1.msra.mxu0 %v939
      %1013 = vmatprep.subr.mxu0 %v944
      %1014 = vmatpush1.msra.mxu0 %v943
      %1015 = vmatprep.subr.mxu0 %v948
      %1016 = vmatpush1.msra.mxu0 %v947
      %1017 = vmatprep.subr.mxu0 %v952
      %1018 = vmatpush1.msra.mxu0 %v951
      %1019 = vmatprep.mubr.f32.mxu0 %v742
      %1020 = vmatmul.mubr.f32.gmra.mrb[0].mxu0 %v740
      %v1021 = vpop.f32.mrb[0].mxu0
      %v1022 = vadd.f32 0.0, %v1021
      %v1023 = vpop.f32.mrb[0].mxu0
      %v1024 = vadd.f32 0.0, %v1023
      %1025 = vdwg.mxu0
      %1026 = vmatprep.subr.mxu0 %v830
      %1027 = vmatpush1.msra.mxu0 %v829
      %1028 = vmatprep.subr.mxu0 %v834
      %1029 = vmatpush1.msra.mxu0 %v833
      %1030 = vmatprep.subr.mxu0 %v838
      %1031 = vmatpush1.msra.mxu0 %v837
      %1032 = vmatprep.subr.mxu0 %v842
      %1033 = vmatpush1.msra.mxu0 %v841
      %1034 = vmatprep.subr.mxu0 %v846
      %1035 = vmatpush1.msra.mxu0 %v845
      %1036 = vmatprep.subr.mxu0 %v850
      %1037 = vmatpush1.msra.mxu0 %v849
      %1038 = vmatprep.subr.mxu0 %v854
      %1039 = vmatpush1.msra.mxu0 %v853
      %1040 = vmatprep.subr.mxu0 %v858
      %1041 = vmatpush1.msra.mxu0 %v857
      %1042 = vmatprep.subr.mxu0 %v862
      %1043 = vmatpush1.msra.mxu0 %v861
      %1044 = vmatprep.subr.mxu0 %v866
      %1045 = vmatpush1.msra.mxu0 %v865
      %1046 = vmatprep.subr.mxu0 %v870
      %1047 = vmatpush1.msra.mxu0 %v869
      %1048 = vmatprep.subr.mxu0 %v874
      %1049 = vmatpush1.msra.mxu0 %v873
      %1050 = vmatprep.subr.mxu0 %v878
      %1051 = vmatpush1.msra.mxu0 %v877
      %1052 = vmatprep.subr.mxu0 %v882
      %1053 = vmatpush1.msra.mxu0 %v881
      %1054 = vmatprep.subr.mxu0 %v886
      %1055 = vmatpush1.msra.mxu0 %v885
      %1056 = vmatprep.subr.mxu0 %v890
      %1057 = vmatpush1.msra.mxu0 %v889
      %1058 = vmatprep.subr.mxu0 %v894
      %1059 = vmatpush1.msra.mxu0 %v893
      %1060 = vmatprep.subr.mxu0 %v898
      %1061 = vmatpush1.msra.mxu0 %v897
      %1062 = vmatprep.subr.mxu0 %v902
      %1063 = vmatpush1.msra.mxu0 %v901
      %1064 = vmatprep.subr.mxu0 %v906
      %1065 = vmatpush1.msra.mxu0 %v905
      %1066 = vmatprep.subr.mxu0 %v910
      %1067 = vmatpush1.msra.mxu0 %v909
      %1068 = vmatprep.subr.mxu0 %v914
      %1069 = vmatpush1.msra.mxu0 %v913
      %1070 = vmatprep.subr.mxu0 %v918
      %1071 = vmatpush1.msra.mxu0 %v917
      %1072 = vmatprep.subr.mxu0 %v922
      %1073 = vmatpush1.msra.mxu0 %v921
      %1074 = vmatprep.subr.mxu0 %v926
      %1075 = vmatpush1.msra.mxu0 %v925
      %1076 = vmatprep.subr.mxu0 %v930
      %1077 = vmatpush1.msra.mxu0 %v929
      %1078 = vmatprep.subr.mxu0 %v934
      %1079 = vmatpush1.msra.mxu0 %v933
      %1080 = vmatprep.subr.mxu0 %v938
      %1081 = vmatpush1.msra.mxu0 %v937
      %1082 = vmatprep.subr.mxu0 %v942
      %1083 = vmatpush1.msra.mxu0 %v941
      %1084 = vmatprep.subr.mxu0 %v946
      %1085 = vmatpush1.msra.mxu0 %v945
      %1086 = vmatprep.subr.mxu0 %v950
      %1087 = vmatpush1.msra.mxu0 %v949
      %1088 = vmatprep.subr.mxu0 %v954
      %1089 = vmatpush1.msra.mxu0 %v953
      %1090 = vmatprep.mubr.f32.mxu0 %v742
      %1091 = vmatmul.mubr.f32.gmra.mrb[0].mxu0 %v740
      %v1092 = vpop.f32.mrb[0].mxu0
      %v1093 = vadd.f32 0.0, %v1092
      %v1094 = vpop.f32.mrb[0].mxu0
      %v1095 = vadd.f32 0.0, %v1094
      %1096 = vdwg.mxu0
      %v1097 = vld [vmem:[%s5] sm:$0xff]
      %v1098 = vld [vmem:[%s6] sm:$0xff]
      %v1100 = vcombine.high %v1097, %v1097
      %v1102 = vmul.f32 %v1022, %v1097
      %v1103 = vmul.f32 %v1024, %v1100
      %v1105 = vcombine.high %v1098, %v1098
      %v1107 = vmul.f32 %v1093, %v1098
      %v1108 = vmul.f32 %v1095, %v1105
      %v1109 = vsub.f32 %v1102, %v1107
      %v1110 = vsub.f32 %v1103, %v1108
      %1111 = vst [vmem:[#allocation3] sm:$0xf] %v1109
      %1112 = vst [vmem:[#allocation3 + $0x8] sm:$0xf] %v1110
      %v1113 = vmul.f32 %v1022, %v1098
      %v1114 = vmul.f32 %v1024, %v1105
      %v1115 = vmul.f32 %v1093, %v1097
      %v1116 = vmul.f32 %v1095, %v1100
      %v1117 = vadd.f32 %v1113, %v1115
      %v1118 = vadd.f32 %v1114, %v1116
      %v1121 = vrot.slane %v1117, 4
      %v1122 = vrot.slane %v1118, 4
      %1125 = vst [vmem:[#allocation3] sm:$0xf0] %v1121
      %1126 = vst [vmem:[#allocation3 + $0x8] sm:$0xf0] %v1122
      %v1127 = vld [vmem:[#allocation3] sm:$0xff]
      %v1128 = vld [vmem:[#allocation3 + $0x8] sm:$0xff]
      %1129 = vmatprep.subr.mxu0 %v828
      %1130 = vmatpush1.msra.mxu0 %v827
      %1131 = vmatprep.subr.mxu0 %v832
      %1132 = vmatpush1.msra.mxu0 %v831
      %1133 = vmatprep.subr.mxu0 %v836
      %1134 = vmatpush1.msra.mxu0 %v835
      %1135 = vmatprep.subr.mxu0 %v840
      %1136 = vmatpush1.msra.mxu0 %v839
      %1137 = vmatprep.subr.mxu0 %v844
      %1138 = vmatpush1.msra.mxu0 %v843
      %1139 = vmatprep.subr.mxu0 %v848
      %1140 = vmatpush1.msra.mxu0 %v847
      %1141 = vmatprep.subr.mxu0 %v852
      %1142 = vmatpush1.msra.mxu0 %v851
      %1143 = vmatprep.subr.mxu0 %v856
      %1144 = vmatpush1.msra.mxu0 %v855
      %1145 = vmatprep.subr.mxu0 %v860
      %1146 = vmatpush1.msra.mxu0 %v859
      %1147 = vmatprep.subr.mxu0 %v864
      %1148 = vmatpush1.msra.mxu0 %v863
      %1149 = vmatprep.subr.mxu0 %v868
      %1150 = vmatpush1.msra.mxu0 %v867
      %1151 = vmatprep.subr.mxu0 %v872
      %1152 = vmatpush1.msra.mxu0 %v871
      %1153 = vmatprep.subr.mxu0 %v876
      %1154 = vmatpush1.msra.mxu0 %v875
      %1155 = vmatprep.subr.mxu0 %v880
      %1156 = vmatpush1.msra.mxu0 %v879
      %1157 = vmatprep.subr.mxu0 %v884
      %1158 = vmatpush1.msra.mxu0 %v883
      %1159 = vmatprep.subr.mxu0 %v888
      %1160 = vmatpush1.msra.mxu0 %v887
      %1161 = vmatprep.subr.mxu0 %v892
      %1162 = vmatpush1.msra.mxu0 %v891
      %1163 = vmatprep.subr.mxu0 %v896
      %1164 = vmatpush1.msra.mxu0 %v895
      %1165 = vmatprep.subr.mxu0 %v900
      %1166 = vmatpush1.msra.mxu0 %v899
      %1167 = vmatprep.subr.mxu0 %v904
      %1168 = vmatpush1.msra.mxu0 %v903
      %1169 = vmatprep.subr.mxu0 %v908
      %1170 = vmatpush1.msra.mxu0 %v907
      %1171 = vmatprep.subr.mxu0 %v912
      %1172 = vmatpush1.msra.mxu0 %v911
      %1173 = vmatprep.subr.mxu0 %v916
      %1174 = vmatpush1.msra.mxu0 %v915
      %1175 = vmatprep.subr.mxu0 %v920
      %1176 = vmatpush1.msra.mxu0 %v919
      %1177 = vmatprep.subr.mxu0 %v924
      %1178 = vmatpush1.msra.mxu0 %v923
      %1179 = vmatprep.subr.mxu0 %v928
      %1180 = vmatpush1.msra.mxu0 %v927
      %1181 = vmatprep.subr.mxu0 %v932
      %1182 = vmatpush1.msra.mxu0 %v931
      %1183 = vmatprep.subr.mxu0 %v936
      %1184 = vmatpush1.msra.mxu0 %v935
      %1185 = vmatprep.subr.mxu0 %v940
      %1186 = vmatpush1.msra.mxu0 %v939
      %1187 = vmatprep.subr.mxu0 %v944
      %1188 = vmatpush1.msra.mxu0 %v943
      %1189 = vmatprep.subr.mxu0 %v948
      %1190 = vmatpush1.msra.mxu0 %v947
      %1191 = vmatprep.subr.mxu0 %v952
      %1192 = vmatpush1.msra.mxu0 %v951
      %1193 = vmatprep.mubr.f32.mxu0 %v1128
      %1194 = vmatmul.mubr.f32.gmra.mrb[0].mxu0 %v1127
      %v1195 = vpop.f32.mrb[0].mxu0
      %v1196 = vadd.f32 0.0, %v1195
      %v1197 = vpop.f32.mrb[0].mxu0
      %v1198 = vadd.f32 0.0, %v1197
      %1199 = vdwg.mxu0
      %1200 = vmatprep.subr.mxu0 %v830
      %1201 = vmatpush1.msra.mxu0 %v829
      %1202 = vmatprep.subr.mxu0 %v834
      %1203 = vmatpush1.msra.mxu0 %v833
      %1204 = vmatprep.subr.mxu0 %v838
      %1205 = vmatpush1.msra.mxu0 %v837
      %1206 = vmatprep.subr.mxu0 %v842
      %1207 = vmatpush1.msra.mxu0 %v841
      %1208 = vmatprep.subr.mxu0 %v846
      %1209 = vmatpush1.msra.mxu0 %v845
      %1210 = vmatprep.subr.mxu0 %v850
      %1211 = vmatpush1.msra.mxu0 %v849
      %1212 = vmatprep.subr.mxu0 %v854
      %1213 = vmatpush1.msra.mxu0 %v853
      %1214 = vmatprep.subr.mxu0 %v858
      %1215 = vmatpush1.msra.mxu0 %v857
      %1216 = vmatprep.subr.mxu0 %v862
      %1217 = vmatpush1.msra.mxu0 %v861
      %1218 = vmatprep.subr.mxu0 %v866
      %1219 = vmatpush1.msra.mxu0 %v865
      %1220 = vmatprep.subr.mxu0 %v870
      %1221 = vmatpush1.msra.mxu0 %v869
      %1222 = vmatprep.subr.mxu0 %v874
      %1223 = vmatpush1.msra.mxu0 %v873
      %1224 = vmatprep.subr.mxu0 %v878
      %1225 = vmatpush1.msra.mxu0 %v877
      %1226 = vmatprep.subr.mxu0 %v882
      %1227 = vmatpush1.msra.mxu0 %v881
      %1228 = vmatprep.subr.mxu0 %v886
      %1229 = vmatpush1.msra.mxu0 %v885
      %1230 = vmatprep.subr.mxu0 %v890
      %1231 = vmatpush1.msra.mxu0 %v889
      %1232 = vmatprep.subr.mxu0 %v894
      %1233 = vmatpush1.msra.mxu0 %v893
      %1234 = vmatprep.subr.mxu0 %v898
      %1235 = vmatpush1.msra.mxu0 %v897
      %1236 = vmatprep.subr.mxu0 %v902
      %1237 = vmatpush1.msra.mxu0 %v901
      %1238 = vmatprep.subr.mxu0 %v906
      %1239 = vmatpush1.msra.mxu0 %v905
      %1240 = vmatprep.subr.mxu0 %v910
      %1241 = vmatpush1.msra.mxu0 %v909
      %1242 = vmatprep.subr.mxu0 %v914
      %1243 = vmatpush1.msra.mxu0 %v913
      %1244 = vmatprep.subr.mxu0 %v918
      %1245 = vmatpush1.msra.mxu0 %v917
      %1246 = vmatprep.subr.mxu0 %v922
      %1247 = vmatpush1.msra.mxu0 %v921
      %1248 = vmatprep.subr.mxu0 %v926
      %1249 = vmatpush1.msra.mxu0 %v925
      %1250 = vmatprep.subr.mxu0 %v930
      %1251 = vmatpush1.msra.mxu0 %v929
      %1252 = vmatprep.subr.mxu0 %v934
      %1253 = vmatpush1.msra.mxu0 %v933
      %1254 = vmatprep.subr.mxu0 %v938
      %1255 = vmatpush1.msra.mxu0 %v937
      %1256 = vmatprep.subr.mxu0 %v942
      %1257 = vmatpush1.msra.mxu0 %v941
      %1258 = vmatprep.subr.mxu0 %v946
      %1259 = vmatpush1.msra.mxu0 %v945
      %1260 = vmatprep.subr.mxu0 %v950
      %1261 = vmatpush1.msra.mxu0 %v949
      %1262 = vmatprep.subr.mxu0 %v954
      %1263 = vmatpush1.msra.mxu0 %v953
      %1264 = vmatprep.mubr.f32.mxu0 %v1128
      %1265 = vmatmul.mubr.f32.gmra.mrb[0].mxu0 %v1127
      %v1266 = vpop.f32.mrb[0].mxu0
      %v1267 = vadd.f32 0.0, %v1266
      %v1268 = vpop.f32.mrb[0].mxu0
      %v1269 = vadd.f32 0.0, %v1268
      %1270 = vdwg.mxu0
      %v1273 = vrot.slane %v1267, 4
      %v1274 = vrot.slane %v1269, 4
      %v1277 = vadd.f32 %v1196, %v1273
      %v1278 = vadd.f32 %v1198, %v1274
      %v1279 = vsub.f32 %v1196, %v1273
      %v1280 = vsub.f32 %v1198, %v1274
      %1281 = vrot.lane.b32.xlu0 %v825, 17
      %v1282 = vpop.permute.xlu0 %1281
      %1283 = vrot.lane.b32.xlu0 %v826, 17
      %v1284 = vpop.permute.xlu0 %1283
      %v1285 = vsel %vm455, %v1282, %v1284
      %v1286 = vsel %vm455, %v1284, %v1282
      %v1287 = vmul.f32 %v1286, %v461
      %v1288 = vmul.f32 %v1285, %v465
      %1289 = vst [vmem:[#allocation2] sm:$0xff] %v1287
      %1290 = vst [vmem:[#allocation2 + $0x8] sm:$0xff] %v1288
      %1291 = vrot.lane.b32.xlu0 %v825, 16
      %v1292 = vpop.permute.xlu0 %1291
      %1293 = vrot.lane.b32.xlu0 %v826, 16
      %v1294 = vpop.permute.xlu0 %1293
      %v1295 = vsel %vm474, %v1292, %v1294
      %v1296 = vsel %vm474, %v1294, %v1292
      %v1297 = vmul.f32 %v1296, %v480
      %v1298 = vmul.f32 %v1295, %v484
      %1299 = vst [vmem:[#allocation2 + $0x10] sm:$0xff] %v1297
      %1300 = vst [vmem:[#allocation2 + $0x18] sm:$0xff] %v1298
      %1301 = vrot.lane.b32.xlu0 %v825, 15
      %v1302 = vpop.permute.xlu0 %1301
      %1303 = vrot.lane.b32.xlu0 %v826, 15
      %v1304 = vpop.permute.xlu0 %1303
      %v1305 = vsel %vm499, %v1302, %v1304
      %v1306 = vsel %vm499, %v1304, %v1302
      %v1307 = vmul.f32 %v1306, %v505
      %v1308 = vmul.f32 %v1305, %v509
      %1309 = vst [vmem:[#allocation2 + $0x20] sm:$0xff] %v1307
      %1310 = vst [vmem:[#allocation2 + $0x28] sm:$0xff] %v1308
      %1311 = vrot.lane.b32.xlu0 %v825, 1
      %v1312 = vpop.permute.xlu0 %1311
      %1313 = vrot.lane.b32.xlu0 %v826, 1
      %v1314 = vpop.permute.xlu0 %1313
      %v1315 = vsel %vm518, %v1312, %v1314
      %v1316 = vsel %vm518, %v1314, %v1312
      %v1317 = vmul.f32 %v1316, %v524
      %v1318 = vmul.f32 %v1315, %v528
      %1319 = vst [vmem:[#allocation2 + $0x30] sm:$0xff] %v1317
      %1320 = vst [vmem:[#allocation2 + $0x38] sm:$0xff] %v1318
      %v1321 = vmul.f32 %v825, %v542
      %v1322 = vmul.f32 %v826, %v546
      %1323 = vst [vmem:[#allocation2 + $0x40] sm:$0xff] %v1321
      %1324 = vst [vmem:[#allocation2 + $0x48] sm:$0xff] %v1322
      %1325 = vrot.lane.b32.xlu0 %v825, 127
      %v1326 = vpop.permute.xlu0 %1325
      %1327 = vrot.lane.b32.xlu0 %v826, 127
      %v1328 = vpop.permute.xlu0 %1327
      %v1329 = vsel %vm561, %v1326, %v1328
      %v1330 = vsel %vm561, %v1328, %v1326
      %v1331 = vmul.f32 %v1329, %v567
      %v1332 = vmul.f32 %v1330, %v571
      %1333 = vst [vmem:[#allocation2 + $0x50] sm:$0xff] %v1331
      %1334 = vst [vmem:[#allocation2 + $0x58] sm:$0xff] %v1332
      %1335 = vrot.lane.b32.xlu0 %v825, 113
      %v1336 = vpop.permute.xlu0 %1335
      %1337 = vrot.lane.b32.xlu0 %v826, 113
      %v1338 = vpop.permute.xlu0 %1337
      %v1339 = vsel %vm586, %v1336, %v1338
      %v1340 = vsel %vm586, %v1338, %v1336
      %v1341 = vmul.f32 %v1339, %v592
      %v1342 = vmul.f32 %v1340, %v596
      %1343 = vst [vmem:[#allocation2 + $0x60] sm:$0xff] %v1341
      %1344 = vst [vmem:[#allocation2 + $0x68] sm:$0xff] %v1342
      %1345 = vrot.lane.b32.xlu0 %v825, 112
      %v1346 = vpop.permute.xlu0 %1345
      %1347 = vrot.lane.b32.xlu0 %v826, 112
      %v1348 = vpop.permute.xlu0 %1347
      %v1349 = vsel %vm605, %v1346, %v1348
      %v1350 = vsel %vm605, %v1348, %v1346
      %v1351 = vmul.f32 %v1349, %v611
      %v1352 = vmul.f32 %v1350, %v615
      %1353 = vst [vmem:[#allocation2 + $0x70] sm:$0xff] %v1351
      %1354 = vst [vmem:[#allocation2 + $0x78] sm:$0xff] %v1352
      %1355 = vrot.lane.b32.xlu0 %v825, 111
      %v1356 = vpop.permute.xlu0 %1355
      %1357 = vrot.lane.b32.xlu0 %v826, 111
      %v1358 = vpop.permute.xlu0 %1357
      %v1359 = vsel %vm630, %v1356, %v1358
      %v1360 = vsel %vm630, %v1358, %v1356
      %v1361 = vmul.f32 %v1359, %v636
      %v1362 = vmul.f32 %v1360, %v640
      %1363 = vst [vmem:[#allocation2 + $0x80] sm:$0xff] %v1361
      %1364 = vst [vmem:[#allocation2 + $0x88] sm:$0xff] %v1362
      %v1365 = vld [vmem:[#allocation2] sm:$0xff]
      %v1366 = vld [vmem:[#allocation2 + $0x8] sm:$0xff]
      %v1367 = vld [vmem:[#allocation2 + $0x10] sm:$0xff]
      %v1368 = vld [vmem:[#allocation2 + $0x18] sm:$0xff]
      %v1369 = vld [vmem:[#allocation2 + $0x20] sm:$0xff]
      %v1370 = vld [vmem:[#allocation2 + $0x28] sm:$0xff]
      %v1371 = vld [vmem:[#allocation2 + $0x30] sm:$0xff]
      %v1372 = vld [vmem:[#allocation2 + $0x38] sm:$0xff]
      %v1373 = vld [vmem:[#allocation2 + $0x40] sm:$0xff]
      %v1374 = vld [vmem:[#allocation2 + $0x48] sm:$0xff]
      %v1375 = vld [vmem:[#allocation2 + $0x50] sm:$0xff]
      %v1376 = vld [vmem:[#allocation2 + $0x58] sm:$0xff]
      %v1377 = vld [vmem:[#allocation2 + $0x60] sm:$0xff]
      %v1378 = vld [vmem:[#allocation2 + $0x68] sm:$0xff]
      %v1379 = vld [vmem:[#allocation2 + $0x70] sm:$0xff]
      %v1380 = vld [vmem:[#allocation2 + $0x78] sm:$0xff]
      %v1381 = vld [vmem:[#allocation2 + $0x80] sm:$0xff]
      %v1382 = vld [vmem:[#allocation2 + $0x88] sm:$0xff]
      %v1383 = vld [vmem:[%s9] sm:$0xff]
      %v1384 = vld [vmem:[%s10] sm:$0xff]
      %1386 = vset.pattern.permute.xlu0 0
      %1387 = vperm.xlu0 %1386, %v1384
      %v1388 = vpop.permute.xlu0 %1387
      %vm1390 = vcmask 588800
      %v1392 = vsel %vm1390, %v1383, 0
      %1394 = vmatprep.subr.mxu0 %v1366
      %1395 = vmatpush1.msra.mxu0 %v1365
      %1396 = vmatprep.subr.mxu0 %v1368
      %1397 = vmatpush1.msra.mxu0 %v1367
      %1398 = vmatprep.subr.mxu0 %v1370
      %1399 = vmatpush1.msra.mxu0 %v1369
      %1400 = vmatprep.subr.mxu0 %v1372
      %1401 = vmatpush1.msra.mxu0 %v1371
      %1402 = vmatprep.subr.mxu0 %v1374
      %1403 = vmatpush1.msra.mxu0 %v1373
      %1404 = vmatprep.subr.mxu0 %v1376
      %1405 = vmatpush1.msra.mxu0 %v1375
      %1406 = vmatprep.subr.mxu0 %v1378
      %1407 = vmatpush1.msra.mxu0 %v1377
      %1408 = vmatprep.subr.mxu0 %v1380
      %1409 = vmatpush1.msra.mxu0 %v1379
      %1410 = vmatprep.subr.mxu0 %v1382
      %1411 = vmatpush1.msra.mxu0 %v1381
      %1412 = vmatprep.subr.mxu0 0.0
      %1413 = vmatpush1.msra.mxu0 0.0
      %1414 = vmatprep.subr.mxu0 0.0
      %1415 = vmatpush1.msra.mxu0 0.0
      %1416 = vmatprep.subr.mxu0 0.0
      %1417 = vmatpush1.msra.mxu0 0.0
      %1418 = vmatprep.subr.mxu0 0.0
      %1419 = vmatpush1.msra.mxu0 0.0
      %1420 = vmatprep.subr.mxu0 0.0
      %1421 = vmatpush1.msra.mxu0 0.0
      %1422 = vmatprep.subr.mxu0 0.0
      %1423 = vmatpush1.msra.mxu0 0.0
      %1424 = vmatprep.subr.mxu0 0.0
      %1425 = vmatpush1.msra.mxu0 0.0
      %1426 = vmatprep.subr.mxu0 0.0
      %1427 = vmatpush1.msra.mxu0 0.0
      %1428 = vmatprep.subr.mxu0 0.0
      %1429 = vmatpush1.msra.mxu0 0.0
      %1430 = vmatprep.subr.mxu0 0.0
      %1431 = vmatpush1.msra.mxu0 0.0
      %1432 = vmatprep.subr.mxu0 0.0
      %1433 = vmatpush1.msra.mxu0 0.0
      %1434 = vmatprep.subr.mxu0 0.0
      %1435 = vmatpush1.msra.mxu0 0.0
      %1436 = vmatprep.subr.mxu0 0.0
      %1437 = vmatpush1.msra.mxu0 0.0
      %1438 = vmatprep.subr.mxu0 0.0
      %1439 = vmatpush1.msra.mxu0 0.0
      %1440 = vmatprep.subr.mxu0 0.0
      %1441 = vmatpush1.msra.mxu0 0.0
      %1442 = vmatprep.subr.mxu0 0.0
      %1443 = vmatpush1.msra.mxu0 0.0
      %1444 = vmatprep.subr.mxu0 0.0
      %1445 = vmatpush1.msra.mxu0 0.0
      %1446 = vmatprep.subr.mxu0 0.0
      %1447 = vmatpush1.msra.mxu0 0.0
      %1448 = vmatprep.subr.mxu0 0.0
      %1449 = vmatpush1.msra.mxu0 0.0
      %1450 = vmatprep.subr.mxu0 0.0
      %1451 = vmatpush1.msra.mxu0 0.0
      %1452 = vmatprep.subr.mxu0 0.0
      %1453 = vmatpush1.msra.mxu0 0.0
      %1454 = vmatprep.subr.mxu0 0.0
      %1455 = vmatpush1.msra.mxu0 0.0
      %1456 = vmatprep.subr.mxu0 0.0
      %1457 = vmatpush1.msra.mxu0 0.0
      %1458 = vmatprep.mubr.f32.mxu0 0.0
      %1459 = vmatmul.mubr.f32.gmra.mrb[0].mxu0 %v1392
      %v1460 = vpop.f32.mrb[0].mxu0
      %v1461 = vadd.f32 %v1388, %v1460
      %v1462 = vpop.f32.mrb[0].mxu0
      %v1463 = vadd.f32 %v1388, %v1462
      %1464 = vdwg.mxu0
      %v1465 = vmax.f32 %v1461, 0.0
      %v1466 = vmax.f32 %v1463, 0.0
      %1467 = vst [vmem:[#allocation4] sm:$0xff] %v1465
      %1468 = vst [vmem:[#allocation4 + $0x8] sm:$0xff] %v1466
      %1469 = vst [vmem:[#allocation4 + $0x10] sm:$0xf] %v1277
      %1470 = vst [vmem:[#allocation4 + $0x18] sm:$0xf] %v1278
      %1471 = vst [vmem:[#allocation4 + $0x10] sm:$0xf0] %v1279
      %1472 = vst [vmem:[#allocation4 + $0x18] sm:$0xf0] %v1280
      %v1473 = vld [vmem:[#allocation4] sm:$0xff]
      %v1474 = vld [vmem:[#allocation4 + $0x8] sm:$0xff]
      %v1475 = vld [vmem:[#allocation4 + $0x10] sm:$0xff]
      %v1476 = vld [vmem:[#allocation4 + $0x18] sm:$0xff]
      %1477 = vrot.lane.b32.xlu0 %v1473, 17
      %v1478 = vpop.permute.xlu0 %1477
      %1479 = vrot.lane.b32.xlu0 %v1475, 17
      %v1480 = vpop.permute.xlu0 %1479
      %1481 = vrot.lane.b32.xlu0 %v1474, 17
      %v1482 = vpop.permute.xlu0 %1481
      %1483 = vrot.lane.b32.xlu0 %v1476, 17
      %v1484 = vpop.permute.xlu0 %1483
      %v1485 = vsel %vm455, %v1478, %v1482
      %v1486 = vsel %vm455, %v1480, %v1484
      %v1487 = vsel %vm455, %v1482, %v1478
      %v1488 = vsel %vm455, %v1484, %v1480
      %v1489 = vmul.f32 %v1487, %v461
      %v1490 = vmul.f32 %v1485, %v465
      %v1491 = vmul.f32 %v1488, %v461
      %v1492 = vmul.f32 %v1486, %v465
      %1493 = vst [vmem:[#allocation2] sm:$0xff] %v1489
      %1494 = vst [vmem:[#allocation2 + $0x8] sm:$0xff] %v1490
      %1495 = vst [vmem:[#allocation2 + $0x10] sm:$0xff] %v1491
      %1496 = vst [vmem:[#allocation2 + $0x18] sm:$0xff] %v1492
      %1497 = vrot.lane.b32.xlu0 %v1473, 16
      %v1498 = vpop.permute.xlu0 %1497
      %1499 = vrot.lane.b32.xlu0 %v1475, 16
      %v1500 = vpop.permute.xlu0 %1499
      %1501 = vrot.lane.b32.xlu0 %v1474, 16
      %v1502 = vpop.permute.xlu0 %1501
      %1503 = vrot.lane.b32.xlu0 %v1476, 16
      %v1504 = vpop.permute.xlu0 %1503
      %v1505 = vsel %vm474, %v1498, %v1502
      %v1506 = vsel %vm474, %v1500, %v1504
      %v1507 = vsel %vm474, %v1502, %v1498
      %v1508 = vsel %vm474, %v1504, %v1500
      %v1509 = vmul.f32 %v1507, %v480
      %v1510 = vmul.f32 %v1505, %v484
      %v1511 = vmul.f32 %v1508, %v480
      %v1512 = vmul.f32 %v1506, %v484
      %1513 = vst [vmem:[#allocation2 + $0x20] sm:$0xff] %v1509
      %1514 = vst [vmem:[#allocation2 + $0x28] sm:$0xff] %v1510
      %1515 = vst [vmem:[#allocation2 + $0x30] sm:$0xff] %v1511
      %1516 = vst [vmem:[#allocation2 + $0x38] sm:$0xff] %v1512
      %1517 = vrot.lane.b32.xlu0 %v1473, 15
      %v1518 = vpop.permute.xlu0 %1517
      %1519 = vrot.lane.b32.xlu0 %v1475, 15
      %v1520 = vpop.permute.xlu0 %1519
      %1521 = vrot.lane.b32.xlu0 %v1474, 15
      %v1522 = vpop.permute.xlu0 %1521
      %1523 = vrot.lane.b32.xlu0 %v1476, 15
      %v1524 = vpop.permute.xlu0 %1523
      %v1525 = vsel %vm499, %v1518, %v1522
      %v1526 = vsel %vm499, %v1520, %v1524
      %v1527 = vsel %vm499, %v1522, %v1518
      %v1528 = vsel %vm499, %v1524, %v1520
      %v1529 = vmul.f32 %v1527, %v505
      %v1530 = vmul.f32 %v1525, %v509
      %v1531 = vmul.f32 %v1528, %v505
      %v1532 = vmul.f32 %v1526, %v509
      %1533 = vst [vmem:[#allocation2 + $0x40] sm:$0xff] %v1529
      %1534 = vst [vmem:[#allocation2 + $0x48] sm:$0xff] %v1530
      %1535 = vst [vmem:[#allocation2 + $0x50] sm:$0xff] %v1531
      %1536 = vst [vmem:[#allocation2 + $0x58] sm:$0xff] %v1532
      %1537 = vrot.lane.b32.xlu0 %v1473, 1
      %v1538 = vpop.permute.xlu0 %1537
      %1539 = vrot.lane.b32.xlu0 %v1475, 1
      %v1540 = vpop.permute.xlu0 %1539
      %1541 = vrot.lane.b32.xlu0 %v1474, 1
      %v1542 = vpop.permute.xlu0 %1541
      %1543 = vrot.lane.b32.xlu0 %v1476, 1
      %v1544 = vpop.permute.xlu0 %1543
      %v1545 = vsel %vm518, %v1538, %v1542
      %v1546 = vsel %vm518, %v1540, %v1544
      %v1547 = vsel %vm518, %v1542, %v1538
      %v1548 = vsel %vm518, %v1544, %v1540
      %v1549 = vmul.f32 %v1547, %v524
      %v1550 = vmul.f32 %v1545, %v528
      %v1551 = vmul.f32 %v1548, %v524
      %v1552 = vmul.f32 %v1546, %v528
      %1553 = vst [vmem:[#allocation2 + $0x60] sm:$0xff] %v1549
      %1554 = vst [vmem:[#allocation2 + $0x68] sm:$0xff] %v1550
      %1555 = vst [vmem:[#allocation2 + $0x70] sm:$0xff] %v1551
      %1556 = vst [vmem:[#allocation2 + $0x78] sm:$0xff] %v1552
      %v1557 = vmul.f32 %v1473, %v542
      %v1558 = vmul.f32 %v1474, %v546
      %v1559 = vmul.f32 %v1475, %v542
      %v1560 = vmul.f32 %v1476, %v546
      %1561 = vst [vmem:[#allocation2 + $0x80] sm:$0xff] %v1557
      %1562 = vst [vmem:[#allocation2 + $0x88] sm:$0xff] %v1558
      %1563 = vst [vmem:[#allocation2 + $0x90] sm:$0xff] %v1559
      %1564 = vst [vmem:[#allocation2 + $0x98] sm:$0xff] %v1560
      %1565 = vrot.lane.b32.xlu0 %v1473, 127
      %v1566 = vpop.permute.xlu0 %1565
      %1567 = vrot.lane.b32.xlu0 %v1475, 127
      %v1568 = vpop.permute.xlu0 %1567
      %1569 = vrot.lane.b32.xlu0 %v1474, 127
      %v1570 = vpop.permute.xlu0 %1569
      %1571 = vrot.lane.b32.xlu0 %v1476, 127
      %v1572 = vpop.permute.xlu0 %1571
      %v1573 = vsel %vm561, %v1566, %v1570
      %v1574 = vsel %vm561, %v1568, %v1572
      %v1575 = vsel %vm561, %v1570, %v1566
      %v1576 = vsel %vm561, %v1572, %v1568
      %v1577 = vmul.f32 %v1573, %v567
      %v1578 = vmul.f32 %v1575, %v571
      %v1579 = vmul.f32 %v1574, %v567
      %v1580 = vmul.f32 %v1576, %v571
      %1581 = vst [vmem:[#allocation2 + $0xa0] sm:$0xff] %v1577
      %1582 = vst [vmem:[#allocation2 + $0xa8] sm:$0xff] %v1578
      %1583 = vst [vmem:[#allocation2 + $0xb0] sm:$0xff] %v1579
      %1584 = vst [vmem:[#allocation2 + $0xb8] sm:$0xff] %v1580
      %1585 = vrot.lane.b32.xlu0 %v1473, 113
      %v1586 = vpop.permute.xlu0 %1585
      %1587 = vrot.lane.b32.xlu0 %v1475, 113
      %v1588 = vpop.permute.xlu0 %1587
      %1589 = vrot.lane.b32.xlu0 %v1474, 113
      %v1590 = vpop.permute.xlu0 %1589
      %1591 = vrot.lane.b32.xlu0 %v1476, 113
      %v1592 = vpop.permute.xlu0 %1591
      %v1593 = vsel %vm586, %v1586, %v1590
      %v1594 = vsel %vm586, %v1588, %v1592
      %v1595 = vsel %vm586, %v1590, %v1586
      %v1596 = vsel %vm586, %v1592, %v1588
      %v1597 = vmul.f32 %v1593, %v592
      %v1598 = vmul.f32 %v1595, %v596
      %v1599 = vmul.f32 %v1594, %v592
      %v1600 = vmul.f32 %v1596, %v596
      %1601 = vst [vmem:[#allocation2 + $0xc0] sm:$0xff] %v1597
      %1602 = vst [vmem:[#allocation2 + $0xc8] sm:$0xff] %v1598
      %1603 = vst [vmem:[#allocation2 + $0xd0] sm:$0xff] %v1599
      %1604 = vst [vmem:[#allocation2 + $0xd8] sm:$0xff] %v1600
      %1605 = vrot.lane.b32.xlu0 %v1473, 112
      %v1606 = vpop.permute.xlu0 %1605
      %1607 = vrot.lane.b32.xlu0 %v1475, 112
      %v1608 = vpop.permute.xlu0 %1607
      %1609 = vrot.lane.b32.xlu0 %v1474, 112
      %v1610 = vpop.permute.xlu0 %1609
      %1611 = vrot.lane.b32.xlu0 %v1476, 112
      %v1612 = vpop.permute.xlu0 %1611
      %v1613 = vsel %vm605, %v1606, %v1610
      %v1614 = vsel %vm605, %v1608, %v1612
      %v1615 = vsel %vm605, %v1610, %v1606
      %v1616 = vsel %vm605, %v1612, %v1608
      %v1617 = vmul.f32 %v1613, %v611
      %v1618 = vmul.f32 %v1615, %v615
      %v1619 = vmul.f32 %v1614, %v611
      %v1620 = vmul.f32 %v1616, %v615
      %1621 = vst [vmem:[#allocation2 + $0xe0] sm:$0xff] %v1617
      %1622 = vst [vmem:[#allocation2 + $0xe8] sm:$0xff] %v1618
      %1623 = vst [vmem:[#allocation2 + $0xf0] sm:$0xff] %v1619
      %1624 = vst [vmem:[#allocation2 + $0xf8] sm:$0xff] %v1620
      %1625 = vrot.lane.b32.xlu0 %v1473, 111
      %v1626 = vpop.permute.xlu0 %1625
      %1627 = vrot.lane.b32.xlu0 %v1475, 111
      %v1628 = vpop.permute.xlu0 %1627
      %1629 = vrot.lane.b32.xlu0 %v1474, 111
      %v1630 = vpop.permute.xlu0 %1629
      %1631 = vrot.lane.b32.xlu0 %v1476, 111
      %v1632 = vpop.permute.xlu0 %1631
      %v1633 = vsel %vm630, %v1626, %v1630
      %v1634 = vsel %vm630, %v1628, %v1632
      %v1635 = vsel %vm630, %v1630, %v1626
      %v1636 = vsel %vm630, %v1632, %v1628
      %v1637 = vmul.f32 %v1633, %v636
      %v1638 = vmul.f32 %v1635, %v640
      %v1639 = vmul.f32 %v1634, %v636
      %v1640 = vmul.f32 %v1636, %v640
      %1641 = vst [vmem:[#allocation2 + $0x100] sm:$0xff] %v1637
      %1642 = vst [vmem:[#allocation2 + $0x108] sm:$0xff] %v1638
      %1643 = vst [vmem:[#allocation2 + $0x110] sm:$0xff] %v1639
      %1644 = vst [vmem:[#allocation2 + $0x118] sm:$0xff] %v1640
      %v1645 = vld [vmem:[#allocation2] sm:$0xff]
      %v1646 = vld [vmem:[#allocation2 + $0x8] sm:$0xff]
      %v1647 = vld [vmem:[#allocation2 + $0x10] sm:$0xff]
      %v1648 = vld [vmem:[#allocation2 + $0x18] sm:$0xff]
      %v1649 = vld [vmem:[#allocation2 + $0x20] sm:$0xff]
      %v1650 = vld [vmem:[#allocation2 + $0x28] sm:$0xff]
      %v1651 = vld [vmem:[#allocation2 + $0x30] sm:$0xff]
      %v1652 = vld [vmem:[#allocation2 + $0x38] sm:$0xff]
      %v1653 = vld [vmem:[#allocation2 + $0x40] sm:$0xff]
      %v1654 = vld [vmem:[#allocation2 + $0x48] sm:$0xff]
      %v1655 = vld [vmem:[#allocation2 + $0x50] sm:$0xff]
      %v1656 = vld [vmem:[#allocation2 + $0x58] sm:$0xff]
      %v1657 = vld [vmem:[#allocation2 + $0x60] sm:$0xff]
      %v1658 = vld [vmem:[#allocation2 + $0x68] sm:$0xff]
      %v1659 = vld [vmem:[#allocation2 + $0x70] sm:$0xff]
      %v1660 = vld [vmem:[#allocation2 + $0x78] sm:$0xff]
      %v1661 = vld [vmem:[#allocation2 + $0x80] sm:$0xff]
      %v1662 = vld [vmem:[#allocation2 + $0x88] sm:$0xff]
      %v1663 = vld [vmem:[#allocation2 + $0x90] sm:$0xff]
      %v1664 = vld [vmem:[#allocation2 + $0x98] sm:$0xff]
      %v1665 = vld [vmem:[#allocation2 + $0xa0] sm:$0xff]
      %v1666 = vld [vmem:[#allocation2 + $0xa8] sm:$0xff]
      %v1667 = vld [vmem:[#allocation2 + $0xb0] sm:$0xff]
      %v1668 = vld [vmem:[#allocation2 + $0xb8] sm:$0xff]
      %v1669 = vld [vmem:[#allocation2 + $0xc0] sm:$0xff]
      %v1670 = vld [vmem:[#allocation2 + $0xc8] sm:$0xff]
      %v1671 = vld [vmem:[#allocation2 + $0xd0] sm:$0xff]
      %v1672 = vld [vmem:[#allocation2 + $0xd8] sm:$0xff]
      %v1673 = vld [vmem:[#allocation2 + $0xe0] sm:$0xff]
      %v1674 = vld [vmem:[#allocation2 + $0xe8] sm:$0xff]
      %v1675 = vld [vmem:[#allocation2 + $0xf0] sm:$0xff]
      %v1676 = vld [vmem:[#allocation2 + $0xf8] sm:$0xff]
      %v1677 = vld [vmem:[#allocation2 + $0x100] sm:$0xff]
      %v1678 = vld [vmem:[#allocation2 + $0x108] sm:$0xff]
      %v1679 = vld [vmem:[#allocation2 + $0x110] sm:$0xff]
      %v1680 = vld [vmem:[#allocation2 + $0x118] sm:$0xff]
      %v1681 = vld [vmem:[%s11] sm:$0xff]
      %v1682 = vld [vmem:[%s11 + $0x8] sm:$0xff]
      %v1683 = vld [vmem:[%s11 + $0x10] sm:$0xff]
      %v1684 = vld [vmem:[%s11 + $0x18] sm:$0xff]
      %v1685 = vld [vmem:[%s12] sm:$0xff]
      %v1686 = vld [vmem:[%s12 + $0x8] sm:$0xff]
      %1688 = vset.pattern.permute.xlu0 0
      %1689 = vperm.xlu0 %1688, %v1685
      %v1690 = vpop.permute.xlu0 %1689
      %1693 = vset.pattern.permute.xlu0 0
      %1694 = vperm.xlu0 %1693, %v1686
      %v1695 = vpop.permute.xlu0 %1694
      %vm1697 = vcmask 130048
      %v1699 = vsel %vm1697, %v1682, 0
      %v1702 = vsel %vm1697, %v1684, 0
      %1704 = vmatprep.subr.mxu0 %v1646
      %1705 = vmatpush1.msra.mxu0 %v1645
      %1706 = vmatprep.subr.mxu0 %v1648
      %1707 = vmatpush1.msra.mxu0 %v1647
      %1708 = vmatprep.subr.mxu0 %v1650
      %1709 = vmatpush1.msra.mxu0 %v1649
      %1710 = vmatprep.subr.mxu0 %v1652
      %1711 = vmatpush1.msra.mxu0 %v1651
      %1712 = vmatprep.subr.mxu0 %v1654
      %1713 = vmatpush1.msra.mxu0 %v1653
      %1714 = vmatprep.subr.mxu0 %v1656
      %1715 = vmatpush1.msra.mxu0 %v1655
      %1716 = vmatprep.subr.mxu0 %v1658
      %1717 = vmatpush1.msra.mxu0 %v1657
      %1718 = vmatprep.subr.mxu0 %v1660
      %1719 = vmatpush1.msra.mxu0 %v1659
      %1720 = vmatprep.subr.mxu0 %v1662
      %1721 = vmatpush1.msra.mxu0 %v1661
      %1722 = vmatprep.subr.mxu0 %v1664
      %1723 = vmatpush1.msra.mxu0 %v1663
      %1724 = vmatprep.subr.mxu0 %v1666
      %1725 = vmatpush1.msra.mxu0 %v1665
      %1726 = vmatprep.subr.mxu0 %v1668
      %1727 = vmatpush1.msra.mxu0 %v1667
      %1728 = vmatprep.subr.mxu0 %v1670
      %1729 = vmatpush1.msra.mxu0 %v1669
      %1730 = vmatprep.subr.mxu0 %v1672
      %1731 = vmatpush1.msra.mxu0 %v1671
      %1732 = vmatprep.subr.mxu0 %v1674
      %1733 = vmatpush1.msra.mxu0 %v1673
      %1734 = vmatprep.subr.mxu0 %v1676
      %1735 = vmatpush1.msra.mxu0 %v1675
      %1736 = vmatprep.subr.mxu0 %v1678
      %1737 = vmatpush1.msra.mxu0 %v1677
      %1738 = vmatprep.subr.mxu0 %v1680
      %1739 = vmatpush1.msra.mxu0 %v1679
      %1740 = vmatprep.subr.mxu0 0.0
      %1741 = vmatpush1.msra.mxu0 0.0
      %1742 = vmatprep.subr.mxu0 0.0
      %1743 = vmatpush1.msra.mxu0 0.0
      %1744 = vmatprep.subr.mxu0 0.0
      %1745 = vmatpush1.msra.mxu0 0.0
      %1746 = vmatprep.subr.mxu0 0.0
      %1747 = vmatpush1.msra.mxu0 0.0
      %1748 = vmatprep.subr.mxu0 0.0
      %1749 = vmatpush1.msra.mxu0 0.0
      %1750 = vmatprep.subr.mxu0 0.0
      %1751 = vmatpush1.msra.mxu0 0.0
      %1752 = vmatprep.subr.mxu0 0.0
      %1753 = vmatpush1.msra.mxu0 0.0
      %1754 = vmatprep.subr.mxu0 0.0
      %1755 = vmatpush1.msra.mxu0 0.0
      %1756 = vmatprep.subr.mxu0 0.0
      %1757 = vmatpush1.msra.mxu0 0.0
      %1758 = vmatprep.subr.mxu0 0.0
      %1759 = vmatpush1.msra.mxu0 0.0
      %1760 = vmatprep.subr.mxu0 0.0
      %1761 = vmatpush1.msra.mxu0 0.0
      %1762 = vmatprep.subr.mxu0 0.0
      %1763 = vmatpush1.msra.mxu0 0.0
      %1764 = vmatprep.subr.mxu0 0.0
      %1765 = vmatpush1.msra.mxu0 0.0
      %1766 = vmatprep.subr.mxu0 0.0
      %1767 = vmatpush1.msra.mxu0 0.0
      %1768 = vmatprep.mubr.f32.mxu0 %v1699
      %1769 = vmatmul.mubr.f32.gmra.mrb[0].mxu0 %v1681
      %v1770 = vpop.f32.mrb[0].mxu0
      %v1771 = vadd.f32 %v1690, %v1770
      %v1772 = vpop.f32.mrb[0].mxu0
      %v1773 = vadd.f32 %v1690, %v1772
      %1774 = vmatprep.mubr.f32.mxu0 %v1702
      %1775 = vmatmul.mubr.f32.gmra.mrb[0].mxu0 %v1683
      %v1776 = vpop.f32.mrb[0].mxu0
      %v1777 = vadd.f32 %v1695, %v1776
      %v1778 = vpop.f32.mrb[0].mxu0
      %v1779 = vadd.f32 %v1695, %v1778
      %1780 = vdwg.mxu0
      %v1781 = vmax.f32 %v1771, 0.0
      %v1782 = vmax.f32 %v1773, 0.0
      %v1783 = vmax.f32 %v1777, 0.0
      %v1784 = vmax.f32 %v1779, 0.0
      %1785 = vst [vmem:[%s440] sm:$0xff] %v1781
      %1786 = vst [vmem:[%s440 + $0x8] sm:$0xff] %v1782
      %1787 = vst [vmem:[%s440 + $0x10] sm:$0xff] %v1783
      %1788 = vst [vmem:[%s440 + $0x18] sm:$0xff] %v1784
      %p1789 = scmp.lt.s32.totalorder %s24, 1
      %s1790 = scalar_select %p1789, %s24, 1
      %s1791 = smul.addr %s1790, 4
      %s1792 = smul.addr %s1791, 8
      %s1793 = scalar_lea.vmem %s13, %s1792
      // Predicated region
      $region73: #{flex_sf_forward.1} parent=71 // pred_check
        %p1794 = pneg %p320
      $region74: #{flex_sf_forward.1} parent=71 // pred_check_branch
        %1796 = sbr.rel (%p1794) target = $region76
      $region75: #{flex_sf_forward.1} parent=71 // pred_region
        _
      $region76: #{flex_sf_forward.1} parent=71 // pred_fallthru
        _
    $region72: #{flex_sf_forward.1} parent=5 // pred_fallthru
      _
    %p1797 = scmp.le.s32.totalorder 2, %s19
    // Predicated region
    $region77: #{flex_sf_forward.1} parent=5 // pred_check
      %p1798 = pneg %p1797
    $region78: #{flex_sf_forward.1} parent=5 // pred_check_branch
      %1800 = sbr.rel (%p1798) target = $region80
    $region79: #{flex_sf_forward.1} parent=5 // pred_region
      %s1801 = ssub.s32 %s19, 2
      // Predicated region
      $region81: #{flex_sf_forward.1} parent=79 // pred_check
        %p1802 = pneg %p326
      $region82: #{flex_sf_forward.1} parent=79 // pred_check_branch
        %1804 = sbr.rel (%p1802) target = $region84
      $region83: #{flex_sf_forward.1} parent=79 // pred_region
        %p1805 = scmp.lt.s32.totalorder %s25, 1
        %s1806 = scalar_select %p1805, %s25, 1
        %s1807 = smul.addr %s1806, 4
        %s1808 = smul.addr %s1807, 8
        %s1809 = scalar_lea.vmem %s13, %s1808
      $region84: #{flex_sf_forward.1} parent=79 // pred_fallthru
        _
    $region80: #{flex_sf_forward.1} parent=5 // pred_fallthru
      _
  $region6: #{flex_sf_forward.1} parent=0 // loop_footer
    %s23 = sadd.s32 1, %s19
  $region7: #{flex_sf_forward.1} parent=0 // loop_footer_branch
    %18 = sbr.rel target = $region3
  $region8: #{flex_sf_forward.1} parent=0 // loop_exit
    _

</llo_original>
